<compile_context>
chip_gen: v7x
topology: tpu7x:2x2x1
jax: 0.10.0
libtpu: 0.0.40
codegen_flags: <defaults>
</compile_context>

<pallas_src>
import functools
import math

import jax
import jax.numpy as jnp
from jax.experimental import pallas as pl
from jax.experimental.pallas import tpu as pltpu

NUM_CAPSULES = 8
OUT_CHANNELS = 32
KSIZE = 9
STRIDE = 2


def _primarycaps_kernel(p_ref, w_ref, b_ref, o_ref, *, num_capsules):
    """p_ref: [M, K] im2col patches; w_ref: [K, N]; b_ref: [1, N]; o_ref: [M, N].

    N = num_capsules * out_channels, columns ordered capsule-major
    (col = cap * out_channels + ch).  Squash is applied over the capsule axis.
    """
    n = o_ref.shape[1]
    oc = n // num_capsules

    # Fused conv-as-matmul for all 8 capsules: one MXU pass, f32 accumulation.
    u = jnp.dot(p_ref[...], w_ref[...], preferred_element_type=jnp.float32)
    u = u + b_ref[...]                                      # [1, N] broadcast

    # squared_norm over the capsules at each (position, channel).
    sq = u * u
    ssum = sq[:, 0:oc]
    for cap in range(1, num_capsules):
        ssum = ssum + sq[:, cap * oc:(cap + 1) * oc]        # [M, oc]

    # squash factor:  (sn/(1+sn)) / sqrt(sn)  ==  sqrt(sn) / (1 + sn)
    factor = jnp.sqrt(ssum) / (1.0 + ssum)                  # [M, oc]
    factor = jnp.tile(factor, (1, num_capsules))            # [M, N], matches column order

    o_ref[...] = (u * factor).astype(o_ref.dtype)


def prepare_params(weights, biases):
    """One-time parameter layout prep (hoisted out of the per-call path).

    weights: [num_caps, out_ch, in_ch, 9, 9]   (PyTorch Conv2d layout, stacked)
    biases:  [num_caps, out_ch]
    Returns W_all [in_ch*81, num_caps*out_ch] and b_all [1, num_caps*out_ch],
    columns ordered cap*out_ch + ch.
    """
    ncaps, oc, ic, kh, kw = weights.shape
    w_all = weights.reshape(ncaps * oc, ic * kh * kw).T
    b_all = biases.reshape(1, ncaps * oc)
    return jnp.asarray(w_all), jnp.asarray(b_all)


def _im2col(x, ksize, stride):
    """x: [B, C, H, W] -> patches [B*OH*OW, C*k*k].

    Row order:    b*OH*OW + oh*OW + ow
    Column order: c*k*k + kh*k + kw   (matches PyTorch weight.reshape order).
    Pure strided-slice layout work done in the wrapper (no compute).
    """
    b, c, h, w = x.shape
    oh = (h - ksize) // stride + 1
    ow = (w - ksize) // stride + 1
    cols = []
    for kh in range(ksize):
        for kw in range(ksize):
            sl = jax.lax.slice(
                x, (0, 0, kh, kw),
                (b, c, kh + stride * (oh - 1) + 1, kw + stride * (ow - 1) + 1),
                (1, 1, stride, stride))                     # [B, C, OH, OW]
            cols.append(sl.reshape(b, c, oh * ow))
    stacked = jnp.stack(cols, axis=2)                       # [B, C, k*k, OH*OW]
    patches = stacked.reshape(b, c * ksize * ksize, oh * ow)
    patches = patches.transpose(0, 2, 1).reshape(b * oh * ow, c * ksize * ksize)
    return patches, oh, ow


def primarycaps_forward(x, w_all, b_all, *, num_capsules=NUM_CAPSULES):
    """x: [B, C, H, W]; w_all/b_all from prepare_params.

    Returns u_squash with PyTorch layout [B, out_ch*OH*OW, num_capsules]."""
    bsz = x.shape[0]
    patches, oh, ow = _im2col(x, KSIZE, STRIDE)             # [B*P, K]
    m, k = patches.shape
    n = w_all.shape[1]
    oc = n // num_capsules

    kernel = functools.partial(_primarycaps_kernel, num_capsules=num_capsules)
    out_mat = pl.pallas_call(
        kernel,
        out_shape=jax.ShapeDtypeStruct((m, n), x.dtype),
        in_specs=[pl.BlockSpec(memory_space=pltpu.MemorySpace.VMEM)] * 3,
        out_specs=pl.BlockSpec(memory_space=pltpu.MemorySpace.VMEM),
        cost_estimate=pl.CostEstimate(
            flops=2 * m * k * n,
            transcendentals=0,
            bytes_accessed=4 * (m * k + k * n + n + m * n)),
    )(patches, w_all, b_all)                                # [B*P, num_caps*oc]

    # Layout plumbing back to the PyTorch output convention [B, oc*OH*OW, caps].
    u = out_mat.reshape(bsz, oh * ow, num_capsules, oc)
    u = u.transpose(0, 3, 1, 2).reshape(bsz, oc * oh * ow, num_capsules)
    return u


def primarycaps_reference(x, weights, biases):
    """Faithful JAX port of the PyTorch module (per-capsule conv + cat + squash)."""
    b = x.shape[0]
    ncaps = weights.shape[0]
    us = []
    for cap in range(ncaps):
        y = jax.lax.conv_general_dilated(
            x, weights[cap], window_strides=(STRIDE, STRIDE), padding='VALID',
            dimension_numbers=('NCHW', 'OIHW', 'NCHW'))
        y = y + biases[cap][None, :, None, None]
        us.append(y.reshape(b, -1, 1))
    u = jnp.concatenate(us, axis=-1)
    sn = jnp.sum(u * u, axis=-1, keepdims=True)
    return (sn / (1.0 + sn)) * u / jnp.sqrt(sn)


if __name__ == "__main__":
    # Shapes consistent with the module's forward: batch_size=1 (hard-coded in the
    # PyTorch view), out_channels=32 and 6x6 conv output (hard-coded 32*6*6), so
    # input spatial must be 20x20 with kernel 9 / stride 2.  in_channels kept small.
    batch = 1
    in_channels = 32
    height = width = 20

    key = jax.random.PRNGKey(0)
    k_w, k_b, k_x = jax.random.split(key, 3)

    # Conv2d default init: U(-stdv, stdv), stdv = 1/sqrt(fan_in).
    stdv = 1.0 / math.sqrt(in_channels * KSIZE * KSIZE)
    weights = jax.random.uniform(
        k_w, (NUM_CAPSULES, OUT_CHANNELS, in_channels, KSIZE, KSIZE),
        jnp.float32, -stdv, stdv)
    biases = jax.random.uniform(
        k_b, (NUM_CAPSULES, OUT_CHANNELS), jnp.float32, -stdv, stdv)
    x = jax.random.normal(k_x, (batch, in_channels, height, width), jnp.float32)

    w_all, b_all = prepare_params(weights, biases)          # one-time layout work

    out = primarycaps_forward(x, w_all, b_all)
    jax.block_until_ready(out)

    ref = primarycaps_reference(x, weights, biases)
    assert out.shape == ref.shape == (batch, OUT_CHANNELS * 6 * 6, NUM_CAPSULES)
    max_err = float(jnp.max(jnp.abs(out - ref)))
    assert jnp.allclose(out, ref, atol=3e-3, rtol=3e-3), max_err

    print("KERNEL_OK")
</pallas_src>

<mosaic_0001>
module attributes {stable_mosaic.version = 11 : i64} {
  func.func @_primarycaps_kernel(%arg0: memref<36x2592xf32, #tpu.memory_space<vmem>>, %arg1: memref<2592x256xf32, #tpu.memory_space<vmem>>, %arg2: memref<1x256xf32, #tpu.memory_space<vmem>>, %arg3: memref<36x256xf32, #tpu.memory_space<vmem>>) attributes {dimension_semantics = [], scalar_prefetch = 0 : i64, scratch_operands = 0 : i64, tpu.core_type = #tpu.core_type<tc>} {
    %c0 = arith.constant 0 : index
    %c0_0 = arith.constant 0 : index
    %0 = vector.load %arg0[%c0, %c0_0] : memref<36x2592xf32, #tpu.memory_space<vmem>>, vector<36x2592xf32>
    %c0_1 = arith.constant 0 : index
    %c0_2 = arith.constant 0 : index
    %1 = vector.load %arg1[%c0_1, %c0_2] : memref<2592x256xf32, #tpu.memory_space<vmem>>, vector<2592x256xf32>
    %cst = arith.constant dense<0.000000e+00> : vector<36x256xf32>
    %2 = tpu.matmul %0, %1, %cst {dimension_numbers = #tpu.dot_dimension_numbers<[1], [0], [0], [1], [0, 0, 1, 1], [], []>} : vector<36x2592xf32>, vector<2592x256xf32>, vector<36x256xf32> -> vector<36x256xf32>
    %c0_3 = arith.constant 0 : index
    %c0_4 = arith.constant 0 : index
    %3 = vector.load %arg2[%c0_3, %c0_4] : memref<1x256xf32, #tpu.memory_space<vmem>>, vector<1x256xf32>
    %4 = vector.broadcast %3 : vector<1x256xf32> to vector<36x256xf32>
    %5 = arith.addf %2, %4 : vector<36x256xf32>
    %6 = arith.mulf %5, %5 : vector<36x256xf32>
    %7 = vector.extract_strided_slice %6 {offsets = [0, 0], sizes = [36, 32], strides = [1, 1]} : vector<36x256xf32> to vector<36x32xf32>
    %8 = vector.extract_strided_slice %6 {offsets = [0, 32], sizes = [36, 32], strides = [1, 1]} : vector<36x256xf32> to vector<36x32xf32>
    %9 = arith.addf %7, %8 : vector<36x32xf32>
    %10 = vector.extract_strided_slice %6 {offsets = [0, 64], sizes = [36, 32], strides = [1, 1]} : vector<36x256xf32> to vector<36x32xf32>
    %11 = arith.addf %9, %10 : vector<36x32xf32>
    %12 = vector.extract_strided_slice %6 {offsets = [0, 96], sizes = [36, 32], strides = [1, 1]} : vector<36x256xf32> to vector<36x32xf32>
    %13 = arith.addf %11, %12 : vector<36x32xf32>
    %14 = vector.extract_strided_slice %6 {offsets = [0, 128], sizes = [36, 32], strides = [1, 1]} : vector<36x256xf32> to vector<36x32xf32>
    %15 = arith.addf %13, %14 : vector<36x32xf32>
    %16 = vector.extract_strided_slice %6 {offsets = [0, 160], sizes = [36, 32], strides = [1, 1]} : vector<36x256xf32> to vector<36x32xf32>
    %17 = arith.addf %15, %16 : vector<36x32xf32>
    %18 = vector.extract_strided_slice %6 {offsets = [0, 192], sizes = [36, 32], strides = [1, 1]} : vector<36x256xf32> to vector<36x32xf32>
    %19 = arith.addf %17, %18 : vector<36x32xf32>
    %20 = vector.extract_strided_slice %6 {offsets = [0, 224], sizes = [36, 32], strides = [1, 1]} : vector<36x256xf32> to vector<36x32xf32>
    %21 = arith.addf %19, %20 : vector<36x32xf32>
    %22 = math.sqrt %21 : vector<36x32xf32>
    %cst_5 = arith.constant 1.000000e+00 : f32
    %23 = vector.broadcast %cst_5 : f32 to vector<36x32xf32>
    %24 = arith.addf %23, %21 : vector<36x32xf32>
    %25 = arith.divf %22, %24 : vector<36x32xf32>
    %26 = tpu.concatenate %25, %25, %25, %25, %25, %25, %25, %25 in 1 : vector<36x32xf32>, vector<36x32xf32>, vector<36x32xf32>, vector<36x32xf32>, vector<36x32xf32>, vector<36x32xf32>, vector<36x32xf32>, vector<36x32xf32> -> vector<36x256xf32>
    %27 = arith.mulf %5, %26 : vector<36x256xf32>
    %c0_6 = arith.constant 0 : index
    %c0_7 = arith.constant 0 : index
    %28 = vector.load %arg3[%c0_6, %c0_7] : memref<36x256xf32, #tpu.memory_space<vmem>>, vector<36x256xf32>
    tpu.vector_store %arg3[%c0_6, %c0_7], %27 {strides = array<i32>} : memref<36x256xf32, #tpu.memory_space<vmem>>, vector<36x256xf32>,
    return
  }
}

</mosaic_0001>

<llo_original>
// kernel: tpu_custom_call.1
$region0: #{tpu_custom_call.1}
  #allocation0 [shape = 'u32[]', space=smem, size = 0x4, offset = 0x4, fixed_abs, tag = 'smem constant byte address 0x4 - core index']
  #allocation1 [shape = 'u32[144,128]{1,0:T(1,128)}', space=vmem, size = 0x12000, scoped, tag = 'internal scratch']
  %s0 = inlined_call_operand.hbm [shape: f32[36,2592], index: 0, kind: input, shape index: {}]
  %s1 = inlined_call_operand.hbm [shape: f32[2592,256], index: 1, kind: input, shape index: {}]
  %s2 = inlined_call_operand.hbm [shape: f32[1,256], index: 2, kind: input, shape index: {}]
  %s3 = inlined_call_operand.hbm [shape: f32[36,256], index: 3, kind: output, shape index: {}]
  %s4 = sld [smem:[#allocation0]]
  $region34: #{tpu_custom_call.1} parent=0
    _
  %s6 = ssub.s32 1, %s4
  %s7 = scalar_select 0, %s6, %s4
  $region1: #{tpu_custom_call.1} parent=0
    #allocation2 [shape = 'u8[430080]{0}', space=vmem, size = 0x69000, scoped, tag = 'input window, operand 0, single buffered']
    #allocation3 [shape = 's32[1]{0}', space=sflag, size = 0x4, scoped, tag = 'scoped memory for tpu_custom_call.1']
    #allocation4 [shape = 's32[1]{0}', space=sflag, size = 0x4, scoped, tag = 'scoped memory for tpu_custom_call.1']
    #allocation5 [shape = 'u8[2654208]{0}', space=vmem, size = 0x288000, scoped, tag = 'input window, operand 1, single buffered']
    #allocation6 [shape = 's32[1]{0}', space=sflag, size = 0x4, scoped, tag = 'scoped memory for tpu_custom_call.1']
    #allocation7 [shape = 'u8[1024]{0}', space=vmem, size = 0x400, scoped, tag = 'input window, operand 2, single buffered']
    #allocation8 [shape = 'u8[40960]{0}', space=vmem, size = 0xa000, scoped, tag = 'output window, operand 0, single buffered']
    %8 = vsyncpa [#allocation3], 0
    %9 = vsyncpa [#allocation6], 0
    %10 = vsyncpa [#allocation4], 0
    // Predicated region
    $region2: #{tpu_custom_call.1} parent=1 // pred_check
      _
    $region3: #{tpu_custom_call.1} parent=1 // pred_check_branch
      %12 = sbr.rel (0) target = $region5
    $region4: #{tpu_custom_call.1} parent=1 // pred_region
      %s14 = ssub.s32 13440, 13440
      %15 = vsyncadd [#allocation3], %s14
      %s16 = sshll.u32 [#allocation2], 4
      %s17 = int_to_ptr.vmem [resolvable:$true] %s16
      %22 = dma.hbm_to_vmem [thread:$0]  %s0, 13440, %s17, [#allocation3], 2688, 2688, 168
    $region5: #{tpu_custom_call.1} parent=1 // pred_fallthru
      _
    // Predicated region
    $region6: #{tpu_custom_call.1} parent=1 // pred_check
      _
    $region7: #{tpu_custom_call.1} parent=1 // pred_check_branch
      %24 = sbr.rel (0) target = $region9
    $region8: #{tpu_custom_call.1} parent=1 // pred_region
      %s26 = ssub.s32 82944, 82944
      %27 = vsyncadd [#allocation6], %s26
      %s28 = sshll.u32 [#allocation5], 4
      %s29 = int_to_ptr.vmem [resolvable:$true] %s28
      %34 = dma.hbm_to_vmem [thread:$0]  %s1, 82944, %s29, [#allocation6], 256, 256, 16
    $region9: #{tpu_custom_call.1} parent=1 // pred_fallthru
      _
    // Predicated region
    $region10: #{tpu_custom_call.1} parent=1 // pred_check
      _
    $region11: #{tpu_custom_call.1} parent=1 // pred_check_branch
      %36 = sbr.rel (0) target = $region13
    $region12: #{tpu_custom_call.1} parent=1 // pred_region
      %s38 = ssub.s32 32, 32
      %39 = vsyncadd [#allocation6], %s38
      %s41 = sshll.u32 [#allocation7], 4
      %s42 = int_to_ptr.vmem [resolvable:$true] %s41
      %44 = dma.hbm_to_vmem [thread:$0]  %s2, 32, %s42, [#allocation6]
    $region13: #{tpu_custom_call.1} parent=1 // pred_fallthru
      _
    // Predicated region
    $region14: #{tpu_custom_call.1} parent=1 // pred_check
      _
    $region15: #{tpu_custom_call.1} parent=1 // pred_check_branch
      %46 = sbr.rel (0) target = $region17
    $region16: #{tpu_custom_call.1} parent=1 // pred_region
      %47 = dma.done [#allocation3], 13440
    $region17: #{tpu_custom_call.1} parent=1 // pred_fallthru
      _
    // Predicated region
    $region18: #{tpu_custom_call.1} parent=1 // pred_check
      _
    $region19: #{tpu_custom_call.1} parent=1 // pred_check_branch
      %49 = sbr.rel (0) target = $region21
    $region20: #{tpu_custom_call.1} parent=1 // pred_region
      %50 = dma.done [#allocation6], 82944
    $region21: #{tpu_custom_call.1} parent=1 // pred_fallthru
      _
    // Predicated region
    $region22: #{tpu_custom_call.1} parent=1 // pred_check
      _
    $region23: #{tpu_custom_call.1} parent=1 // pred_check_branch
      %52 = sbr.rel (0) target = $region25
    $region24: #{tpu_custom_call.1} parent=1 // pred_region
      %53 = dma.done [#allocation6], 32
    $region25: #{tpu_custom_call.1} parent=1 // pred_fallthru
      _
    %v54 = vld [vmem:[#allocation2] sm:$0xff]
    %v55 = vld [vmem:[#allocation2 + $0x8] sm:$0xff]
    %v56 = vld [vmem:[#allocation2 + $0x10] sm:$0xff]
    %v57 = vld [vmem:[#allocation2 + $0x18] sm:$0xff]
    %v58 = vld [vmem:[#allocation2 + $0x20] sm:$0xff]
    %v59 = vld [vmem:[#allocation2 + $0x28] sm:$0xff]
    %v60 = vld [vmem:[#allocation2 + $0x30] sm:$0xff]
    %v61 = vld [vmem:[#allocation2 + $0x38] sm:$0xff]
    %v62 = vld [vmem:[#allocation2 + $0x40] sm:$0xff]
    %v63 = vld [vmem:[#allocation2 + $0x48] sm:$0xff]
    %v64 = vld [vmem:[#allocation2 + $0x50] sm:$0xff]
    %v65 = vld [vmem:[#allocation2 + $0x58] sm:$0xff]
    %v66 = vld [vmem:[#allocation2 + $0x60] sm:$0xff]
    %v67 = vld [vmem:[#allocation2 + $0x68] sm:$0xff]
    %v68 = vld [vmem:[#allocation2 + $0x70] sm:$0xff]
    %v69 = vld [vmem:[#allocation2 + $0x78] sm:$0xff]
    %v70 = vld [vmem:[#allocation2 + $0x80] sm:$0xff]
    %v71 = vld [vmem:[#allocation2 + $0x88] sm:$0xff]
    %v72 = vld [vmem:[#allocation2 + $0x90] sm:$0xff]
    %v73 = vld [vmem:[#allocation2 + $0x98] sm:$0xff]
    %v74 = vld [vmem:[#allocation2 + $0xa0] sm:$0xff]
    %v75 = vld [vmem:[#allocation2 + $0xa8] sm:$0xff]
    %v76 = vld [vmem:[#allocation2 + $0xb0] sm:$0xff]
    %v77 = vld [vmem:[#allocation2 + $0xb8] sm:$0xff]
    %v78 = vld [vmem:[#allocation2 + $0xc0] sm:$0xff]
    %v79 = vld [vmem:[#allocation2 + $0xc8] sm:$0xff]
    %v80 = vld [vmem:[#allocation2 + $0xd0] sm:$0xff]
    %v81 = vld [vmem:[#allocation2 + $0xd8] sm:$0xff]
    %v82 = vld [vmem:[#allocation2 + $0xe0] sm:$0xff]
    %v83 = vld [vmem:[#allocation2 + $0xe8] sm:$0xff]
    %v84 = vld [vmem:[#allocation2 + $0xf0] sm:$0xff]
    %v85 = vld [vmem:[#allocation2 + $0xf8] sm:$0xff]
    %v86 = vld [vmem:[#allocation2 + $0x100] sm:$0xff]
    %v87 = vld [vmem:[#allocation2 + $0x108] sm:$0xff]
    %v88 = vld [vmem:[#allocation2 + $0x110] sm:$0xff]
    %v89 = vld [vmem:[#allocation2 + $0x118] sm:$0xff]
    %v90 = vld [vmem:[#allocation2 + $0x120] sm:$0xff]
    %v91 = vld [vmem:[#allocation2 + $0x128] sm:$0xff]
    %v92 = vld [vmem:[#allocation2 + $0x130] sm:$0xff]
    %v93 = vld [vmem:[#allocation2 + $0x138] sm:$0xff]
    %v94 = vld [vmem:[#allocation2 + $0x140] sm:$0xff]
    %v95 = vld [vmem:[#allocation2 + $0x148] sm:$0xff]
    %v96 = vld [vmem:[#allocation2 + $0x150] sm:$0xff]
    %v97 = vld [vmem:[#allocation2 + $0x158] sm:$0xff]
    %v98 = vld [vmem:[#allocation2 + $0x160] sm:$0xff]
    %v99 = vld [vmem:[#allocation2 + $0x168] sm:$0xff]
    %v100 = vld [vmem:[#allocation2 + $0x170] sm:$0xff]
    %v101 = vld [vmem:[#allocation2 + $0x178] sm:$0xff]
    %v102 = vld [vmem:[#allocation2 + $0x180] sm:$0xff]
    %v103 = vld [vmem:[#allocation2 + $0x188] sm:$0xff]
    %v104 = vld [vmem:[#allocation2 + $0x190] sm:$0xff]
    %v105 = vld [vmem:[#allocation2 + $0x198] sm:$0xff]
    %v106 = vld [vmem:[#allocation2 + $0x1a0] sm:$0xff]
    %v107 = vld [vmem:[#allocation2 + $0x1a8] sm:$0xff]
    %v108 = vld [vmem:[#allocation2 + $0x1b0] sm:$0xff]
    %v109 = vld [vmem:[#allocation2 + $0x1b8] sm:$0xff]
    %v110 = vld [vmem:[#allocation2 + $0x1c0] sm:$0xff]
    %v111 = vld [vmem:[#allocation2 + $0x1c8] sm:$0xff]
    %v112 = vld [vmem:[#allocation2 + $0x1d0] sm:$0xff]
    %v113 = vld [vmem:[#allocation2 + $0x1d8] sm:$0xff]
    %v114 = vld [vmem:[#allocation2 + $0x1e0] sm:$0xff]
    %v115 = vld [vmem:[#allocation2 + $0x1e8] sm:$0xff]
    %v116 = vld [vmem:[#allocation2 + $0x1f0] sm:$0xff]
    %v117 = vld [vmem:[#allocation2 + $0x1f8] sm:$0xff]
    %v118 = vld [vmem:[#allocation2 + $0x200] sm:$0xff]
    %v119 = vld [vmem:[#allocation2 + $0x208] sm:$0xff]
    %v120 = vld [vmem:[#allocation2 + $0x210] sm:$0xff]
    %v121 = vld [vmem:[#allocation2 + $0x218] sm:$0xff]
    %v122 = vld [vmem:[#allocation2 + $0x220] sm:$0xff]
    %v123 = vld [vmem:[#allocation2 + $0x228] sm:$0xff]
    %v124 = vld [vmem:[#allocation2 + $0x230] sm:$0xff]
    %v125 = vld [vmem:[#allocation2 + $0x238] sm:$0xff]
    %v126 = vld [vmem:[#allocation2 + $0x240] sm:$0xff]
    %v127 = vld [vmem:[#allocation2 + $0x248] sm:$0xff]
    %v128 = vld [vmem:[#allocation2 + $0x250] sm:$0xff]
    %v129 = vld [vmem:[#allocation2 + $0x258] sm:$0xff]
    %v130 = vld [vmem:[#allocation2 + $0x260] sm:$0xff]
    %v131 = vld [vmem:[#allocation2 + $0x268] sm:$0xff]
    %v132 = vld [vmem:[#allocation2 + $0x270] sm:$0xff]
    %v133 = vld [vmem:[#allocation2 + $0x278] sm:$0xff]
    %v134 = vld [vmem:[#allocation2 + $0x280] sm:$0xff]
    %v135 = vld [vmem:[#allocation2 + $0x288] sm:$0xff]
    %v136 = vld [vmem:[#allocation2 + $0x290] sm:$0xff]
    %v137 = vld [vmem:[#allocation2 + $0x298] sm:$0xff]
    %v138 = vld [vmem:[#allocation2 + $0x2a0] sm:$0xf]
    %v139 = vld [vmem:[#allocation2 + $0x2a8] sm:$0xf]
    %v140 = vld [vmem:[#allocation2 + $0x2b0] sm:$0xf]
    %v141 = vld [vmem:[#allocation2 + $0x2b8] sm:$0xf]
    %v142 = vld [vmem:[#allocation2 + $0x2c0] sm:$0xf]
    %v143 = vld [vmem:[#allocation2 + $0x2c8] sm:$0xf]
    %v144 = vld [vmem:[#allocation2 + $0x2d0] sm:$0xf]
    %v145 = vld [vmem:[#allocation2 + $0x2d8] sm:$0xf]
    %v146 = vld [vmem:[#allocation2 + $0x2e0] sm:$0xf]
    %v147 = vld [vmem:[#allocation2 + $0x2e8] sm:$0xf]
    %v148 = vld [vmem:[#allocation2 + $0x2f0] sm:$0xf]
    %v149 = vld [vmem:[#allocation2 + $0x2f8] sm:$0xf]
    %v150 = vld [vmem:[#allocation2 + $0x300] sm:$0xf]
    %v151 = vld [vmem:[#allocation2 + $0x308] sm:$0xf]
    %v152 = vld [vmem:[#allocation2 + $0x310] sm:$0xf]
    %v153 = vld [vmem:[#allocation2 + $0x318] sm:$0xf]
    %v154 = vld [vmem:[#allocation2 + $0x320] sm:$0xf]
    %v155 = vld [vmem:[#allocation2 + $0x328] sm:$0xf]
    %v156 = vld [vmem:[#allocation2 + $0x330] sm:$0xf]
    %v157 = vld [vmem:[#allocation2 + $0x338] sm:$0xf]
    %v158 = vld [vmem:[#allocation2 + $0x340] sm:$0xf]
    %v159 = vld [vmem:[#allocation5] sm:$0xff]
    %v160 = vld [vmem:[#allocation5 + $0x8] sm:$0xff]
    %v161 = vld [vmem:[#allocation5 + $0x10] sm:$0xff]
    %v162 = vld [vmem:[#allocation5 + $0x18] sm:$0xff]
    %v163 = vld [vmem:[#allocation5 + $0x20] sm:$0xff]
    %v164 = vld [vmem:[#allocation5 + $0x28] sm:$0xff]
    %v165 = vld [vmem:[#allocation5 + $0x30] sm:$0xff]
    %v166 = vld [vmem:[#allocation5 + $0x38] sm:$0xff]
    %v167 = vld [vmem:[#allocation5 + $0x40] sm:$0xff]
    %v168 = vld [vmem:[#allocation5 + $0x48] sm:$0xff]
    %v169 = vld [vmem:[#allocation5 + $0x50] sm:$0xff]
    %v170 = vld [vmem:[#allocation5 + $0x58] sm:$0xff]
    %v171 = vld [vmem:[#allocation5 + $0x60] sm:$0xff]
    %v172 = vld [vmem:[#allocation5 + $0x68] sm:$0xff]
    %v173 = vld [vmem:[#allocation5 + $0x70] sm:$0xff]
    %v174 = vld [vmem:[#allocation5 + $0x78] sm:$0xff]
    %v175 = vld [vmem:[#allocation5 + $0x80] sm:$0xff]
    %v176 = vld [vmem:[#allocation5 + $0x88] sm:$0xff]
    %v177 = vld [vmem:[#allocation5 + $0x90] sm:$0xff]
    %v178 = vld [vmem:[#allocation5 + $0x98] sm:$0xff]
    %v179 = vld [vmem:[#allocation5 + $0xa0] sm:$0xff]
    %v180 = vld [vmem:[#allocation5 + $0xa8] sm:$0xff]
    %v181 = vld [vmem:[#allocation5 + $0xb0] sm:$0xff]
    %v182 = vld [vmem:[#allocation5 + $0xb8] sm:$0xff]
    %v183 = vld [vmem:[#allocation5 + $0xc0] sm:$0xff]
    %v184 = vld [vmem:[#allocation5 + $0xc8] sm:$0xff]
    %v185 = vld [vmem:[#allocation5 + $0xd0] sm:$0xff]
    %v186 = vld [vmem:[#allocation5 + $0xd8] sm:$0xff]
    %v187 = vld [vmem:[#allocation5 + $0xe0] sm:$0xff]
    %v188 = vld [vmem:[#allocation5 + $0xe8] sm:$0xff]
    %v189 = vld [vmem:[#allocation5 + $0xf0] sm:$0xff]
    %v190 = vld [vmem:[#allocation5 + $0xf8] sm:$0xff]
    %v191 = vld [vmem:[#allocation5 + $0x100] sm:$0xff]
    %v192 = vld [vmem:[#allocation5 + $0x108] sm:$0xff]
    %v193 = vld [vmem:[#allocation5 + $0x110] sm:$0xff]
    %v194 = vld [vmem:[#allocation5 + $0x118] sm:$0xff]
    %v195 = vld [vmem:[#allocation5 + $0x120] sm:$0xff]
    %v196 = vld [vmem:[#allocation5 + $0x128] sm:$0xff]
    %v197 = vld [vmem:[#allocation5 + $0x130] sm:$0xff]
    %v198 = vld [vmem:[#allocation5 + $0x138] sm:$0xff]
    %v199 = vld [vmem:[#allocation5 + $0x140] sm:$0xff]
    %v200 = vld [vmem:[#allocation5 + $0x148] sm:$0xff]
    %v201 = vld [vmem:[#allocation5 + $0x150] sm:$0xff]
    %v202 = vld [vmem:[#allocation5 + $0x158] sm:$0xff]
    %v203 = vld [vmem:[#allocation5 + $0x160] sm:$0xff]
    %v204 = vld [vmem:[#allocation5 + $0x168] sm:$0xff]
    %v205 = vld [vmem:[#allocation5 + $0x170] sm:$0xff]
    %v206 = vld [vmem:[#allocation5 + $0x178] sm:$0xff]
    %v207 = vld [vmem:[#allocation5 + $0x180] sm:$0xff]
    %v208 = vld [vmem:[#allocation5 + $0x188] sm:$0xff]
    %v209 = vld [vmem:[#allocation5 + $0x190] sm:$0xff]
    %v210 = vld [vmem:[#allocation5 + $0x198] sm:$0xff]
    %v211 = vld [vmem:[#allocation5 + $0x1a0] sm:$0xff]
    %v212 = vld [vmem:[#allocation5 + $0x1a8] sm:$0xff]
    %v213 = vld [vmem:[#allocation5 + $0x1b0] sm:$0xff]
    %v214 = vld [vmem:[#allocation5 + $0x1b8] sm:$0xff]
    %v215 = vld [vmem:[#allocation5 + $0x1c0] sm:$0xff]
    %v216 = vld [vmem:[#allocation5 + $0x1c8] sm:$0xff]
    %v217 = vld [vmem:[#allocation5 + $0x1d0] sm:$0xff]
    %v218 = vld [vmem:[#allocation5 + $0x1d8] sm:$0xff]
    %v219 = vld [vmem:[#allocation5 + $0x1e0] sm:$0xff]
    %v220 = vld [vmem:[#allocation5 + $0x1e8] sm:$0xff]
    %v221 = vld [vmem:[#allocation5 + $0x1f0] sm:$0xff]
    %v222 = vld [vmem:[#allocation5 + $0x1f8] sm:$0xff]
    %v223 = vld [vmem:[#allocation5 + $0x200] sm:$0xff]
    %v224 = vld [vmem:[#allocation5 + $0x208] sm:$0xff]
    %v225 = vld [vmem:[#allocation5 + $0x210] sm:$0xff]
    %v226 = vld [vmem:[#allocation5 + $0x218] sm:$0xff]
    %v227 = vld [vmem:[#allocation5 + $0x220] sm:$0xff]
    %v228 = vld [vmem:[#allocation5 + $0x228] sm:$0xff]
    %v229 = vld [vmem:[#allocation5 + $0x230] sm:$0xff]
    %v230 = vld [vmem:[#allocation5 + $0x238] sm:$0xff]
    %v231 = vld [vmem:[#allocation5 + $0x240] sm:$0xff]
    %v232 = vld [vmem:[#allocation5 + $0x248] sm:$0xff]
    %v233 = vld [vmem:[#allocation5 + $0x250] sm:$0xff]
    %v234 = vld [vmem:[#allocation5 + $0x258] sm:$0xff]
    %v235 = vld [vmem:[#allocation5 + $0x260] sm:$0xff]
    %v236 = vld [vmem:[#allocation5 + $0x268] sm:$0xff]
    %v237 = vld [vmem:[#allocation5 + $0x270] sm:$0xff]
    %v238 = vld [vmem:[#allocation5 + $0x278] sm:$0xff]
    %v239 = vld [vmem:[#allocation5 + $0x280] sm:$0xff]
    %v240 = vld [vmem:[#allocation5 + $0x288] sm:$0xff]
    %v241 = vld [vmem:[#allocation5 + $0x290] sm:$0xff]
    %v242 = vld [vmem:[#allocation5 + $0x298] sm:$0xff]
    %v243 = vld [vmem:[#allocation5 + $0x2a0] sm:$0xff]
    %v244 = vld [vmem:[#allocation5 + $0x2a8] sm:$0xff]
    %v245 = vld [vmem:[#allocation5 + $0x2b0] sm:$0xff]
    %v246 = vld [vmem:[#allocation5 + $0x2b8] sm:$0xff]
    %v247 = vld [vmem:[#allocation5 + $0x2c0] sm:$0xff]
    %v248 = vld [vmem:[#allocation5 + $0x2c8] sm:$0xff]
    %v249 = vld [vmem:[#allocation5 + $0x2d0] sm:$0xff]
    %v250 = vld [vmem:[#allocation5 + $0x2d8] sm:$0xff]
    %v251 = vld [vmem:[#allocation5 + $0x2e0] sm:$0xff]
    %v252 = vld [vmem:[#allocation5 + $0x2e8] sm:$0xff]
    %v253 = vld [vmem:[#allocation5 + $0x2f0] sm:$0xff]
    %v254 = vld [vmem:[#allocation5 + $0x2f8] sm:$0xff]
    %v255 = vld [vmem:[#allocation5 + $0x300] sm:$0xff]
    %v256 = vld [vmem:[#allocation5 + $0x308] sm:$0xff]
    %v257 = vld [vmem:[#allocation5 + $0x310] sm:$0xff]
    %v258 = vld [vmem:[#allocation5 + $0x318] sm:$0xff]
    %v259 = vld [vmem:[#allocation5 + $0x320] sm:$0xff]
    %v260 = vld [vmem:[#allocation5 + $0x328] sm:$0xff]
    %v261 = vld [vmem:[#allocation5 + $0x330] sm:$0xff]
    %v262 = vld [vmem:[#allocation5 + $0x338] sm:$0xff]
    %v263 = vld [vmem:[#allocation5 + $0x340] sm:$0xff]
    %v264 = vld [vmem:[#allocation5 + $0x348] sm:$0xff]
    %v265 = vld [vmem:[#allocation5 + $0x350] sm:$0xff]
    %v266 = vld [vmem:[#allocation5 + $0x358] sm:$0xff]
    %v267 = vld [vmem:[#allocation5 + $0x360] sm:$0xff]
    %v268 = vld [vmem:[#allocation5 + $0x368] sm:$0xff]
    %v269 = vld [vmem:[#allocation5 + $0x370] sm:$0xff]
    %v270 = vld [vmem:[#allocation5 + $0x378] sm:$0xff]
    %v271 = vld [vmem:[#allocation5 + $0x380] sm:$0xff]
    %v272 = vld [vmem:[#allocation5 + $0x388] sm:$0xff]
    %v273 = vld [vmem:[#allocation5 + $0x390] sm:$0xff]
    %v274 = vld [vmem:[#allocation5 + $0x398] sm:$0xff]
    %v275 = vld [vmem:[#allocation5 + $0x3a0] sm:$0xff]
    %v276 = vld [vmem:[#allocation5 + $0x3a8] sm:$0xff]
    %v277 = vld [vmem:[#allocation5 + $0x3b0] sm:$0xff]
    %v278 = vld [vmem:[#allocation5 + $0x3b8] sm:$0xff]
    %v279 = vld [vmem:[#allocation5 + $0x3c0] sm:$0xff]
    %v280 = vld [vmem:[#allocation5 + $0x3c8] sm:$0xff]
    %v281 = vld [vmem:[#allocation5 + $0x3d0] sm:$0xff]
    %v282 = vld [vmem:[#allocation5 + $0x3d8] sm:$0xff]
    %v283 = vld [vmem:[#allocation5 + $0x3e0] sm:$0xff]
    %v284 = vld [vmem:[#allocation5 + $0x3e8] sm:$0xff]
    %v285 = vld [vmem:[#allocation5 + $0x3f0] sm:$0xff]
    %v286 = vld [vmem:[#allocation5 + $0x3f8] sm:$0xff]
    %v287 = vld [vmem:[#allocation5 + $0x400] sm:$0xff]
    %v288 = vld [vmem:[#allocation5 + $0x408] sm:$0xff]
    %v289 = vld [vmem:[#allocation5 + $0x410] sm:$0xff]
    %v290 = vld [vmem:[#allocation5 + $0x418] sm:$0xff]
    %v291 = vld [vmem:[#allocation5 + $0x420] sm:$0xff]
    %v292 = vld [vmem:[#allocation5 + $0x428] sm:$0xff]
    %v293 = vld [vmem:[#allocation5 + $0x430] sm:$0xff]
    %v294 = vld [vmem:[#allocation5 + $0x438] sm:$0xff]
    %v295 = vld [vmem:[#allocation5 + $0x440] sm:$0xff]
    %v296 = vld [vmem:[#allocation5 + $0x448] sm:$0xff]
    %v297 = vld [vmem:[#allocation5 + $0x450] sm:$0xff]
    %v298 = vld [vmem:[#allocation5 + $0x458] sm:$0xff]
    %v299 = vld [vmem:[#allocation5 + $0x460] sm:$0xff]
    %v300 = vld [vmem:[#allocation5 + $0x468] sm:$0xff]
    %v301 = vld [vmem:[#allocation5 + $0x470] sm:$0xff]
    %v302 = vld [vmem:[#allocation5 + $0x478] sm:$0xff]
    %v303 = vld [vmem:[#allocation5 + $0x480] sm:$0xff]
    %v304 = vld [vmem:[#allocation5 + $0x488] sm:$0xff]
    %v305 = vld [vmem:[#allocation5 + $0x490] sm:$0xff]
    %v306 = vld [vmem:[#allocation5 + $0x498] sm:$0xff]
    %v307 = vld [vmem:[#allocation5 + $0x4a0] sm:$0xff]
    %v308 = vld [vmem:[#allocation5 + $0x4a8] sm:$0xff]
    %v309 = vld [vmem:[#allocation5 + $0x4b0] sm:$0xff]
    %v310 = vld [vmem:[#allocation5 + $0x4b8] sm:$0xff]
    %v311 = vld [vmem:[#allocation5 + $0x4c0] sm:$0xff]
    %v312 = vld [vmem:[#allocation5 + $0x4c8] sm:$0xff]
    %v313 = vld [vmem:[#allocation5 + $0x4d0] sm:$0xff]
    %v314 = vld [vmem:[#allocation5 + $0x4d8] sm:$0xff]
    %v315 = vld [vmem:[#allocation5 + $0x4e0] sm:$0xff]
    %v316 = vld [vmem:[#allocation5 + $0x4e8] sm:$0xff]
    %v317 = vld [vmem:[#allocation5 + $0x4f0] sm:$0xff]
    %v318 = vld [vmem:[#allocation5 + $0x4f8] sm:$0xff]
    %v319 = vld [vmem:[#allocation5 + $0x500] sm:$0xff]
    %v320 = vld [vmem:[#allocation5 + $0x508] sm:$0xff]
    %v321 = vld [vmem:[#allocation5 + $0x510] sm:$0xff]
    %v322 = vld [vmem:[#allocation5 + $0x518] sm:$0xff]
    %v323 = vld [vmem:[#allocation5 + $0x520] sm:$0xff]
    %v324 = vld [vmem:[#allocation5 + $0x528] sm:$0xff]
    %v325 = vld [vmem:[#allocation5 + $0x530] sm:$0xff]
    %v326 = vld [vmem:[#allocation5 + $0x538] sm:$0xff]
    %v327 = vld [vmem:[#allocation5 + $0x540] sm:$0xff]
    %v328 = vld [vmem:[#allocation5 + $0x548] sm:$0xff]
    %v329 = vld [vmem:[#allocation5 + $0x550] sm:$0xff]
    %v330 = vld [vmem:[#allocation5 + $0x558] sm:$0xff]
    %v331 = vld [vmem:[#allocation5 + $0x560] sm:$0xff]
    %v332 = vld [vmem:[#allocation5 + $0x568] sm:$0xff]
    %v333 = vld [vmem:[#allocation5 + $0x570] sm:$0xff]
    %v334 = vld [vmem:[#allocation5 + $0x578] sm:$0xff]
    %v335 = vld [vmem:[#allocation5 + $0x580] sm:$0xff]
    %v336 = vld [vmem:[#allocation5 + $0x588] sm:$0xff]
    %v337 = vld [vmem:[#allocation5 + $0x590] sm:$0xff]
    %v338 = vld [vmem:[#allocation5 + $0x598] sm:$0xff]
    %v339 = vld [vmem:[#allocation5 + $0x5a0] sm:$0xff]
    %v340 = vld [vmem:[#allocation5 + $0x5a8] sm:$0xff]
    %v341 = vld [vmem:[#allocation5 + $0x5b0] sm:$0xff]
    %v342 = vld [vmem:[#allocation5 + $0x5b8] sm:$0xff]
    %v343 = vld [vmem:[#allocation5 + $0x5c0] sm:$0xff]
    %v344 = vld [vmem:[#allocation5 + $0x5c8] sm:$0xff]
    %v345 = vld [vmem:[#allocation5 + $0x5d0] sm:$0xff]
    %v346 = vld [vmem:[#allocation5 + $0x5d8] sm:$0xff]
    %v347 = vld [vmem:[#allocation5 + $0x5e0] sm:$0xff]
    %v348 = vld [vmem:[#allocation5 + $0x5e8] sm:$0xff]
    %v349 = vld [vmem:[#allocation5 + $0x5f0] sm:$0xff]
    %v350 = vld [vmem:[#allocation5 + $0x5f8] sm:$0xff]
    %v351 = vld [vmem:[#allocation5 + $0x600] sm:$0xff]
    %v352 = vld [vmem:[#allocation5 + $0x608] sm:$0xff]
    %v353 = vld [vmem:[#allocation5 + $0x610] sm:$0xff]
    %v354 = vld [vmem:[#allocation5 + $0x618] sm:$0xff]
    %v355 = vld [vmem:[#allocation5 + $0x620] sm:$0xff]
    %v356 = vld [vmem:[#allocation5 + $0x628] sm:$0xff]
    %v357 = vld [vmem:[#allocation5 + $0x630] sm:$0xff]
    %v358 = vld [vmem:[#allocation5 + $0x638] sm:$0xff]
    %v359 = vld [vmem:[#allocation5 + $0x640] sm:$0xff]
    %v360 = vld [vmem:[#allocation5 + $0x648] sm:$0xff]
    %v361 = vld [vmem:[#allocation5 + $0x650] sm:$0xff]
    %v362 = vld [vmem:[#allocation5 + $0x658] sm:$0xff]
    %v363 = vld [vmem:[#allocation5 + $0x660] sm:$0xff]
    %v364 = vld [vmem:[#allocation5 + $0x668] sm:$0xff]
    %v365 = vld [vmem:[#allocation5 + $0x670] sm:$0xff]
    %v366 = vld [vmem:[#allocation5 + $0x678] sm:$0xff]
    %v367 = vld [vmem:[#allocation5 + $0x680] sm:$0xff]
    %v368 = vld [vmem:[#allocation5 + $0x688] sm:$0xff]
    %v369 = vld [vmem:[#allocation5 + $0x690] sm:$0xff]
    %v370 = vld [vmem:[#allocation5 + $0x698] sm:$0xff]
    %v371 = vld [vmem:[#allocation5 + $0x6a0] sm:$0xff]
    %v372 = vld [vmem:[#allocation5 + $0x6a8] sm:$0xff]
    %v373 = vld [vmem:[#allocation5 + $0x6b0] sm:$0xff]
    %v374 = vld [vmem:[#allocation5 + $0x6b8] sm:$0xff]
    %v375 = vld [vmem:[#allocation5 + $0x6c0] sm:$0xff]
    %v376 = vld [vmem:[#allocation5 + $0x6c8] sm:$0xff]
    %v377 = vld [vmem:[#allocation5 + $0x6d0] sm:$0xff]
    %v378 = vld [vmem:[#allocation5 + $0x6d8] sm:$0xff]
    %v379 = vld [vmem:[#allocation5 + $0x6e0] sm:$0xff]
    %v380 = vld [vmem:[#allocation5 + $0x6e8] sm:$0xff]
    %v381 = vld [vmem:[#allocation5 + $0x6f0] sm:$0xff]
    %v382 = vld [vmem:[#allocation5 + $0x6f8] sm:$0xff]
    %v383 = vld [vmem:[#allocation5 + $0x700] sm:$0xff]
    %v384 = vld [vmem:[#allocation5 + $0x708] sm:$0xff]
    %v385 = vld [vmem:[#allocation5 + $0x710] sm:$0xff]
    %v386 = vld [vmem:[#allocation5 + $0x718] sm:$0xff]
    %v387 = vld [vmem:[#allocation5 + $0x720] sm:$0xff]
    %v388 = vld [vmem:[#allocation5 + $0x728] sm:$0xff]
    %v389 = vld [vmem:[#allocation5 + $0x730] sm:$0xff]
    %v390 = vld [vmem:[#allocation5 + $0x738] sm:$0xff]
    %v391 = vld [vmem:[#allocation5 + $0x740] sm:$0xff]
    %v392 = vld [vmem:[#allocation5 + $0x748] sm:$0xff]
    %v393 = vld [vmem:[#allocation5 + $0x750] sm:$0xff]
    %v394 = vld [vmem:[#allocation5 + $0x758] sm:$0xff]
    %v395 = vld [vmem:[#allocation5 + $0x760] sm:$0xff]
    %v396 = vld [vmem:[#allocation5 + $0x768] sm:$0xff]
    %v397 = vld [vmem:[#allocation5 + $0x770] sm:$0xff]
    %v398 = vld [vmem:[#allocation5 + $0x778] sm:$0xff]
    %v399 = vld [vmem:[#allocation5 + $0x780] sm:$0xff]
    %v400 = vld [vmem:[#allocation5 + $0x788] sm:$0xff]
    %v401 = vld [vmem:[#allocation5 + $0x790] sm:$0xff]
    %v402 = vld [vmem:[#allocation5 + $0x798] sm:$0xff]
    %v403 = vld [vmem:[#allocation5 + $0x7a0] sm:$0xff]
    %v404 = vld [vmem:[#allocation5 + $0x7a8] sm:$0xff]
    %v405 = vld [vmem:[#allocation5 + $0x7b0] sm:$0xff]
    %v406 = vld [vmem:[#allocation5 + $0x7b8] sm:$0xff]
    %v407 = vld [vmem:[#allocation5 + $0x7c0] sm:$0xff]
    %v408 = vld [vmem:[#allocation5 + $0x7c8] sm:$0xff]
    %v409 = vld [vmem:[#allocation5 + $0x7d0] sm:$0xff]
    %v410 = vld [vmem:[#allocation5 + $0x7d8] sm:$0xff]
    %v411 = vld [vmem:[#allocation5 + $0x7e0] sm:$0xff]
    %v412 = vld [vmem:[#allocation5 + $0x7e8] sm:$0xff]
    %v413 = vld [vmem:[#allocation5 + $0x7f0] sm:$0xff]
    %v414 = vld [vmem:[#allocation5 + $0x7f8] sm:$0xff]
    %v415 = vld [vmem:[#allocation5 + $0x800] sm:$0xff]
    %v416 = vld [vmem:[#allocation5 + $0x808] sm:$0xff]
    %v417 = vld [vmem:[#allocation5 + $0x810] sm:$0xff]
    %v418 = vld [vmem:[#allocation5 + $0x818] sm:$0xff]
    %v419 = vld [vmem:[#allocation5 + $0x820] sm:$0xff]
    %v420 = vld [vmem:[#allocation5 + $0x828] sm:$0xff]
    %v421 = vld [vmem:[#allocation5 + $0x830] sm:$0xff]
    %v422 = vld [vmem:[#allocation5 + $0x838] sm:$0xff]
    %v423 = vld [vmem:[#allocation5 + $0x840] sm:$0xff]
    %v424 = vld [vmem:[#allocation5 + $0x848] sm:$0xff]
    %v425 = vld [vmem:[#allocation5 + $0x850] sm:$0xff]
    %v426 = vld [vmem:[#allocation5 + $0x858] sm:$0xff]
    %v427 = vld [vmem:[#allocation5 + $0x860] sm:$0xff]
    %v428 = vld [vmem:[#allocation5 + $0x868] sm:$0xff]
    %v429 = vld [vmem:[#allocation5 + $0x870] sm:$0xff]
    %v430 = vld [vmem:[#allocation5 + $0x878] sm:$0xff]
    %v431 = vld [vmem:[#allocation5 + $0x880] sm:$0xff]
    %v432 = vld [vmem:[#allocation5 + $0x888] sm:$0xff]
    %v433 = vld [vmem:[#allocation5 + $0x890] sm:$0xff]
    %v434 = vld [vmem:[#allocation5 + $0x898] sm:$0xff]
    %v435 = vld [vmem:[#allocation5 + $0x8a0] sm:$0xff]
    %v436 = vld [vmem:[#allocation5 + $0x8a8] sm:$0xff]
    %v437 = vld [vmem:[#allocation5 + $0x8b0] sm:$0xff]
    %v438 = vld [vmem:[#allocation5 + $0x8b8] sm:$0xff]
    %v439 = vld [vmem:[#allocation5 + $0x8c0] sm:$0xff]
    %v440 = vld [vmem:[#allocation5 + $0x8c8] sm:$0xff]
    %v441 = vld [vmem:[#allocation5 + $0x8d0] sm:$0xff]
    %v442 = vld [vmem:[#allocation5 + $0x8d8] sm:$0xff]
    %v443 = vld [vmem:[#allocation5 + $0x8e0] sm:$0xff]
    %v444 = vld [vmem:[#allocation5 + $0x8e8] sm:$0xff]
    %v445 = vld [vmem:[#allocation5 + $0x8f0] sm:$0xff]
    %v446 = vld [vmem:[#allocation5 + $0x8f8] sm:$0xff]
    %v447 = vld [vmem:[#allocation5 + $0x900] sm:$0xff]
    %v448 = vld [vmem:[#allocation5 + $0x908] sm:$0xff]
    %v449 = vld [vmem:[#allocation5 + $0x910] sm:$0xff]
    %v450 = vld [vmem:[#allocation5 + $0x918] sm:$0xff]
    %v451 = vld [vmem:[#allocation5 + $0x920] sm:$0xff]
    %v452 = vld [vmem:[#allocation5 + $0x928] sm:$0xff]
    %v453 = vld [vmem:[#allocation5 + $0x930] sm:$0xff]
    %v454 = vld [vmem:[#allocation5 + $0x938] sm:$0xff]
    %v455 = vld [vmem:[#allocation5 + $0x940] sm:$0xff]
    %v456 = vld [vmem:[#allocation5 + $0x948] sm:$0xff]
    %v457 = vld [vmem:[#allocation5 + $0x950] sm:$0xff]
    %v458 = vld [vmem:[#allocation5 + $0x958] sm:$0xff]
    %v459 = vld [vmem:[#allocation5 + $0x960] sm:$0xff]
    %v460 = vld [vmem:[#allocation5 + $0x968] sm:$0xff]
    %v461 = vld [vmem:[#allocation5 + $0x970] sm:$0xff]
    %v462 = vld [vmem:[#allocation5 + $0x978] sm:$0xff]
    %v463 = vld [vmem:[#allocation5 + $0x980] sm:$0xff]
    %v464 = vld [vmem:[#allocation5 + $0x988] sm:$0xff]
    %v465 = vld [vmem:[#allocation5 + $0x990] sm:$0xff]
    %v466 = vld [vmem:[#allocation5 + $0x998] sm:$0xff]
    %v467 = vld [vmem:[#allocation5 + $0x9a0] sm:$0xff]
    %v468 = vld [vmem:[#allocation5 + $0x9a8] sm:$0xff]
    %v469 = vld [vmem:[#allocation5 + $0x9b0] sm:$0xff]
    %v470 = vld [vmem:[#allocation5 + $0x9b8] sm:$0xff]
    %v471 = vld [vmem:[#allocation5 + $0x9c0] sm:$0xff]
    %v472 = vld [vmem:[#allocation5 + $0x9c8] sm:$0xff]
    %v473 = vld [vmem:[#allocation5 + $0x9d0] sm:$0xff]
    %v474 = vld [vmem:[#allocation5 + $0x9d8] sm:$0xff]
    %v475 = vld [vmem:[#allocation5 + $0x9e0] sm:$0xff]
    %v476 = vld [vmem:[#allocation5 + $0x9e8] sm:$0xff]
    %v477 = vld [vmem:[#allocation5 + $0x9f0] sm:$0xff]
    %v478 = vld [vmem:[#allocation5 + $0x9f8] sm:$0xff]
    %v479 = vld [vmem:[#allocation5 + $0xa00] sm:$0xff]
    %v480 = vld [vmem:[#allocation5 + $0xa08] sm:$0xff]
    %v481 = vld [vmem:[#allocation5 + $0xa10] sm:$0xff]
    %v482 = vld [vmem:[#allocation5 + $0xa18] sm:$0xff]
    %v483 = vld [vmem:[#allocation5 + $0xa20] sm:$0xff]
    %v484 = vld [vmem:[#allocation5 + $0xa28] sm:$0xff]
    %v485 = vld [vmem:[#allocation5 + $0xa30] sm:$0xff]
    %v486 = vld [vmem:[#allocation5 + $0xa38] sm:$0xff]
    %v487 = vld [vmem:[#allocation5 + $0xa40] sm:$0xff]
    %v488 = vld [vmem:[#allocation5 + $0xa48] sm:$0xff]
    %v489 = vld [vmem:[#allocation5 + $0xa50] sm:$0xff]
    %v490 = vld [vmem:[#allocation5 + $0xa58] sm:$0xff]
    %v491 = vld [vmem:[#allocation5 + $0xa60] sm:$0xff]
    %v492 = vld [vmem:[#allocation5 + $0xa68] sm:$0xff]
    %v493 = vld [vmem:[#allocation5 + $0xa70] sm:$0xff]
    %v494 = vld [vmem:[#allocation5 + $0xa78] sm:$0xff]
    %v495 = vld [vmem:[#allocation5 + $0xa80] sm:$0xff]
    %v496 = vld [vmem:[#allocation5 + $0xa88] sm:$0xff]
    %v497 = vld [vmem:[#allocation5 + $0xa90] sm:$0xff]
    %v498 = vld [vmem:[#allocation5 + $0xa98] sm:$0xff]
    %v499 = vld [vmem:[#allocation5 + $0xaa0] sm:$0xff]
    %v500 = vld [vmem:[#allocation5 + $0xaa8] sm:$0xff]
    %v501 = vld [vmem:[#allocation5 + $0xab0] sm:$0xff]
    %v502 = vld [vmem:[#allocation5 + $0xab8] sm:$0xff]
    %v503 = vld [vmem:[#allocation5 + $0xac0] sm:$0xff]
    %v504 = vld [vmem:[#allocation5 + $0xac8] sm:$0xff]
    %v505 = vld [vmem:[#allocation5 + $0xad0] sm:$0xff]
    %v506 = vld [vmem:[#allocation5 + $0xad8] sm:$0xff]
    %v507 = vld [vmem:[#allocation5 + $0xae0] sm:$0xff]
    %v508 = vld [vmem:[#allocation5 + $0xae8] sm:$0xff]
    %v509 = vld [vmem:[#allocation5 + $0xaf0] sm:$0xff]
    %v510 = vld [vmem:[#allocation5 + $0xaf8] sm:$0xff]
    %v511 = vld [vmem:[#allocation5 + $0xb00] sm:$0xff]
    %v512 = vld [vmem:[#allocation5 + $0xb08] sm:$0xff]
    %v513 = vld [vmem:[#allocation5 + $0xb10] sm:$0xff]
    %v514 = vld [vmem:[#allocation5 + $0xb18] sm:$0xff]
    %v515 = vld [vmem:[#allocation5 + $0xb20] sm:$0xff]
    %v516 = vld [vmem:[#allocation5 + $0xb28] sm:$0xff]
    %v517 = vld [vmem:[#allocation5 + $0xb30] sm:$0xff]
    %v518 = vld [vmem:[#allocation5 + $0xb38] sm:$0xff]
    %v519 = vld [vmem:[#allocation5 + $0xb40] sm:$0xff]
    %v520 = vld [vmem:[#allocation5 + $0xb48] sm:$0xff]
    %v521 = vld [vmem:[#allocation5 + $0xb50] sm:$0xff]
    %v522 = vld [vmem:[#allocation5 + $0xb58] sm:$0xff]
    %v523 = vld [vmem:[#allocation5 + $0xb60] sm:$0xff]
    %v524 = vld [vmem:[#allocation5 + $0xb68] sm:$0xff]
    %v525 = vld [vmem:[#allocation5 + $0xb70] sm:$0xff]
    %v526 = vld [vmem:[#allocation5 + $0xb78] sm:$0xff]
    %v527 = vld [vmem:[#allocation5 + $0xb80] sm:$0xff]
    %v528 = vld [vmem:[#allocation5 + $0xb88] sm:$0xff]
    %v529 = vld [vmem:[#allocation5 + $0xb90] sm:$0xff]
    %v530 = vld [vmem:[#allocation5 + $0xb98] sm:$0xff]
    %v531 = vld [vmem:[#allocation5 + $0xba0] sm:$0xff]
    %v532 = vld [vmem:[#allocation5 + $0xba8] sm:$0xff]
    %v533 = vld [vmem:[#allocation5 + $0xbb0] sm:$0xff]
    %v534 = vld [vmem:[#allocation5 + $0xbb8] sm:$0xff]
    %v535 = vld [vmem:[#allocation5 + $0xbc0] sm:$0xff]
    %v536 = vld [vmem:[#allocation5 + $0xbc8] sm:$0xff]
    %v537 = vld [vmem:[#allocation5 + $0xbd0] sm:$0xff]
    %v538 = vld [vmem:[#allocation5 + $0xbd8] sm:$0xff]
    %v539 = vld [vmem:[#allocation5 + $0xbe0] sm:$0xff]
    %v540 = vld [vmem:[#allocation5 + $0xbe8] sm:$0xff]
    %v541 = vld [vmem:[#allocation5 + $0xbf0] sm:$0xff]
    %v542 = vld [vmem:[#allocation5 + $0xbf8] sm:$0xff]
    %v543 = vld [vmem:[#allocation5 + $0xc00] sm:$0xff]
    %v544 = vld [vmem:[#allocation5 + $0xc08] sm:$0xff]
    %v545 = vld [vmem:[#allocation5 + $0xc10] sm:$0xff]
    %v546 = vld [vmem:[#allocation5 + $0xc18] sm:$0xff]
    %v547 = vld [vmem:[#allocation5 + $0xc20] sm:$0xff]
    %v548 = vld [vmem:[#allocation5 + $0xc28] sm:$0xff]
    %v549 = vld [vmem:[#allocation5 + $0xc30] sm:$0xff]
    %v550 = vld [vmem:[#allocation5 + $0xc38] sm:$0xff]
    %v551 = vld [vmem:[#allocation5 + $0xc40] sm:$0xff]
    %v552 = vld [vmem:[#allocation5 + $0xc48] sm:$0xff]
    %v553 = vld [vmem:[#allocation5 + $0xc50] sm:$0xff]
    %v554 = vld [vmem:[#allocation5 + $0xc58] sm:$0xff]
    %v555 = vld [vmem:[#allocation5 + $0xc60] sm:$0xff]
    %v556 = vld [vmem:[#allocation5 + $0xc68] sm:$0xff]
    %v557 = vld [vmem:[#allocation5 + $0xc70] sm:$0xff]
    %v558 = vld [vmem:[#allocation5 + $0xc78] sm:$0xff]
    %v559 = vld [vmem:[#allocation5 + $0xc80] sm:$0xff]
    %v560 = vld [vmem:[#allocation5 + $0xc88] sm:$0xff]
    %v561 = vld [vmem:[#allocation5 + $0xc90] sm:$0xff]
    %v562 = vld [vmem:[#allocation5 + $0xc98] sm:$0xff]
    %v563 = vld [vmem:[#allocation5 + $0xca0] sm:$0xff]
    %v564 = vld [vmem:[#allocation5 + $0xca8] sm:$0xff]
    %v565 = vld [vmem:[#allocation5 + $0xcb0] sm:$0xff]
    %v566 = vld [vmem:[#allocation5 + $0xcb8] sm:$0xff]
    %v567 = vld [vmem:[#allocation5 + $0xcc0] sm:$0xff]
    %v568 = vld [vmem:[#allocation5 + $0xcc8] sm:$0xff]
    %v569 = vld [vmem:[#allocation5 + $0xcd0] sm:$0xff]
    %v570 = vld [vmem:[#allocation5 + $0xcd8] sm:$0xff]
    %v571 = vld [vmem:[#allocation5 + $0xce0] sm:$0xff]
    %v572 = vld [vmem:[#allocation5 + $0xce8] sm:$0xff]
    %v573 = vld [vmem:[#allocation5 + $0xcf0] sm:$0xff]
    %v574 = vld [vmem:[#allocation5 + $0xcf8] sm:$0xff]
    %v575 = vld [vmem:[#allocation5 + $0xd00] sm:$0xff]
    %v576 = vld [vmem:[#allocation5 + $0xd08] sm:$0xff]
    %v577 = vld [vmem:[#allocation5 + $0xd10] sm:$0xff]
    %v578 = vld [vmem:[#allocation5 + $0xd18] sm:$0xff]
    %v579 = vld [vmem:[#allocation5 + $0xd20] sm:$0xff]
    %v580 = vld [vmem:[#allocation5 + $0xd28] sm:$0xff]
    %v581 = vld [vmem:[#allocation5 + $0xd30] sm:$0xff]
    %v582 = vld [vmem:[#allocation5 + $0xd38] sm:$0xff]
    %v583 = vld [vmem:[#allocation5 + $0xd40] sm:$0xff]
    %v584 = vld [vmem:[#allocation5 + $0xd48] sm:$0xff]
    %v585 = vld [vmem:[#allocation5 + $0xd50] sm:$0xff]
    %v586 = vld [vmem:[#allocation5 + $0xd58] sm:$0xff]
    %v587 = vld [vmem:[#allocation5 + $0xd60] sm:$0xff]
    %v588 = vld [vmem:[#allocation5 + $0xd68] sm:$0xff]
    %v589 = vld [vmem:[#allocation5 + $0xd70] sm:$0xff]
    %v590 = vld [vmem:[#allocation5 + $0xd78] sm:$0xff]
    %v591 = vld [vmem:[#allocation5 + $0xd80] sm:$0xff]
    %v592 = vld [vmem:[#allocation5 + $0xd88] sm:$0xff]
    %v593 = vld [vmem:[#allocation5 + $0xd90] sm:$0xff]
    %v594 = vld [vmem:[#allocation5 + $0xd98] sm:$0xff]
    %v595 = vld [vmem:[#allocation5 + $0xda0] sm:$0xff]
    %v596 = vld [vmem:[#allocation5 + $0xda8] sm:$0xff]
    %v597 = vld [vmem:[#allocation5 + $0xdb0] sm:$0xff]
    %v598 = vld [vmem:[#allocation5 + $0xdb8] sm:$0xff]
    %v599 = vld [vmem:[#allocation5 + $0xdc0] sm:$0xff]
    %v600 = vld [vmem:[#allocation5 + $0xdc8] sm:$0xff]
    %v601 = vld [vmem:[#allocation5 + $0xdd0] sm:$0xff]
    %v602 = vld [vmem:[#allocation5 + $0xdd8] sm:$0xff]
    %v603 = vld [vmem:[#allocation5 + $0xde0] sm:$0xff]
    %v604 = vld [vmem:[#allocation5 + $0xde8] sm:$0xff]
    %v605 = vld [vmem:[#allocation5 + $0xdf0] sm:$0xff]
    %v606 = vld [vmem:[#allocation5 + $0xdf8] sm:$0xff]
    %v607 = vld [vmem:[#allocation5 + $0xe00] sm:$0xff]
    %v608 = vld [vmem:[#allocation5 + $0xe08] sm:$0xff]
    %v609 = vld [vmem:[#allocation5 + $0xe10] sm:$0xff]
    %v610 = vld [vmem:[#allocation5 + $0xe18] sm:$0xff]
    %v611 = vld [vmem:[#allocation5 + $0xe20] sm:$0xff]
    %v612 = vld [vmem:[#allocation5 + $0xe28] sm:$0xff]
    %v613 = vld [vmem:[#allocation5 + $0xe30] sm:$0xff]
    %v614 = vld [vmem:[#allocation5 + $0xe38] sm:$0xff]
    %v615 = vld [vmem:[#allocation5 + $0xe40] sm:$0xff]
    %v616 = vld [vmem:[#allocation5 + $0xe48] sm:$0xff]
    %v617 = vld [vmem:[#allocation5 + $0xe50] sm:$0xff]
    %v618 = vld [vmem:[#allocation5 + $0xe58] sm:$0xff]
    %v619 = vld [vmem:[#allocation5 + $0xe60] sm:$0xff]
    %v620 = vld [vmem:[#allocation5 + $0xe68] sm:$0xff]
    %v621 = vld [vmem:[#allocation5 + $0xe70] sm:$0xff]
    %v622 = vld [vmem:[#allocation5 + $0xe78] sm:$0xff]
    %v623 = vld [vmem:[#allocation5 + $0xe80] sm:$0xff]
    %v624 = vld [vmem:[#allocation5 + $0xe88] sm:$0xff]
    %v625 = vld [vmem:[#allocation5 + $0xe90] sm:$0xff]
    %v626 = vld [vmem:[#allocation5 + $0xe98] sm:$0xff]
    %v627 = vld [vmem:[#allocation5 + $0xea0] sm:$0xff]
    %v628 = vld [vmem:[#allocation5 + $0xea8] sm:$0xff]
    %v629 = vld [vmem:[#allocation5 + $0xeb0] sm:$0xff]
    %v630 = vld [vmem:[#allocation5 + $0xeb8] sm:$0xff]
    %v631 = vld [vmem:[#allocation5 + $0xec0] sm:$0xff]
    %v632 = vld [vmem:[#allocation5 + $0xec8] sm:$0xff]
    %v633 = vld [vmem:[#allocation5 + $0xed0] sm:$0xff]
    %v634 = vld [vmem:[#allocation5 + $0xed8] sm:$0xff]
    %v635 = vld [vmem:[#allocation5 + $0xee0] sm:$0xff]
    %v636 = vld [vmem:[#allocation5 + $0xee8] sm:$0xff]
    %v637 = vld [vmem:[#allocation5 + $0xef0] sm:$0xff]
    %v638 = vld [vmem:[#allocation5 + $0xef8] sm:$0xff]
    %v639 = vld [vmem:[#allocation5 + $0xf00] sm:$0xff]
    %v640 = vld [vmem:[#allocation5 + $0xf08] sm:$0xff]
    %v641 = vld [vmem:[#allocation5 + $0xf10] sm:$0xff]
    %v642 = vld [vmem:[#allocation5 + $0xf18] sm:$0xff]
    %v643 = vld [vmem:[#allocation5 + $0xf20] sm:$0xff]
    %v644 = vld [vmem:[#allocation5 + $0xf28] sm:$0xff]
    %v645 = vld [vmem:[#allocation5 + $0xf30] sm:$0xff]
    %v646 = vld [vmem:[#allocation5 + $0xf38] sm:$0xff]
    %v647 = vld [vmem:[#allocation5 + $0xf40] sm:$0xff]
    %v648 = vld [vmem:[#allocation5 + $0xf48] sm:$0xff]
    %v649 = vld [vmem:[#allocation5 + $0xf50] sm:$0xff]
    %v650 = vld [vmem:[#allocation5 + $0xf58] sm:$0xff]
    %v651 = vld [vmem:[#allocation5 + $0xf60] sm:$0xff]
    %v652 = vld [vmem:[#allocation5 + $0xf68] sm:$0xff]
    %v653 = vld [vmem:[#allocation5 + $0xf70] sm:$0xff]
    %v654 = vld [vmem:[#allocation5 + $0xf78] sm:$0xff]
    %v655 = vld [vmem:[#allocation5 + $0xf80] sm:$0xff]
    %v656 = vld [vmem:[#allocation5 + $0xf88] sm:$0xff]
    %v657 = vld [vmem:[#allocation5 + $0xf90] sm:$0xff]
    %v658 = vld [vmem:[#allocation5 + $0xf98] sm:$0xff]
    %v659 = vld [vmem:[#allocation5 + $0xfa0] sm:$0xff]
    %v660 = vld [vmem:[#allocation5 + $0xfa8] sm:$0xff]
    %v661 = vld [vmem:[#allocation5 + $0xfb0] sm:$0xff]
    %v662 = vld [vmem:[#allocation5 + $0xfb8] sm:$0xff]
    %v663 = vld [vmem:[#allocation5 + $0xfc0] sm:$0xff]
    %v664 = vld [vmem:[#allocation5 + $0xfc8] sm:$0xff]
    %v665 = vld [vmem:[#allocation5 + $0xfd0] sm:$0xff]
    %v666 = vld [vmem:[#allocation5 + $0xfd8] sm:$0xff]
    %v667 = vld [vmem:[#allocation5 + $0xfe0] sm:$0xff]
    %v668 = vld [vmem:[#allocation5 + $0xfe8] sm:$0xff]
    %v669 = vld [vmem:[#allocation5 + $0xff0] sm:$0xff]
    %v670 = vld [vmem:[#allocation5 + $0xff8] sm:$0xff]
    %v671 = vld [vmem:[#allocation5 + $0x1000] sm:$0xff]
    %v672 = vld [vmem:[#allocation5 + $0x1008] sm:$0xff]
    %v673 = vld [vmem:[#allocation5 + $0x1010] sm:$0xff]
    %v674 = vld [vmem:[#allocation5 + $0x1018] sm:$0xff]
    %v675 = vld [vmem:[#allocation5 + $0x1020] sm:$0xff]
    %v676 = vld [vmem:[#allocation5 + $0x1028] sm:$0xff]
    %v677 = vld [vmem:[#allocation5 + $0x1030] sm:$0xff]
    %v678 = vld [vmem:[#allocation5 + $0x1038] sm:$0xff]
    %v679 = vld [vmem:[#allocation5 + $0x1040] sm:$0xff]
    %v680 = vld [vmem:[#allocation5 + $0x1048] sm:$0xff]
    %v681 = vld [vmem:[#allocation5 + $0x1050] sm:$0xff]
    %v682 = vld [vmem:[#allocation5 + $0x1058] sm:$0xff]
    %v683 = vld [vmem:[#allocation5 + $0x1060] sm:$0xff]
    %v684 = vld [vmem:[#allocation5 + $0x1068] sm:$0xff]
    %v685 = vld [vmem:[#allocation5 + $0x1070] sm:$0xff]
    %v686 = vld [vmem:[#allocation5 + $0x1078] sm:$0xff]
    %v687 = vld [vmem:[#allocation5 + $0x1080] sm:$0xff]
    %v688 = vld [vmem:[#allocation5 + $0x1088] sm:$0xff]
    %v689 = vld [vmem:[#allocation5 + $0x1090] sm:$0xff]
    %v690 = vld [vmem:[#allocation5 + $0x1098] sm:$0xff]
    %v691 = vld [vmem:[#allocation5 + $0x10a0] sm:$0xff]
    %v692 = vld [vmem:[#allocation5 + $0x10a8] sm:$0xff]
    %v693 = vld [vmem:[#allocation5 + $0x10b0] sm:$0xff]
    %v694 = vld [vmem:[#allocation5 + $0x10b8] sm:$0xff]
    %v695 = vld [vmem:[#allocation5 + $0x10c0] sm:$0xff]
    %v696 = vld [vmem:[#allocation5 + $0x10c8] sm:$0xff]
    %v697 = vld [vmem:[#allocation5 + $0x10d0] sm:$0xff]
    %v698 = vld [vmem:[#allocation5 + $0x10d8] sm:$0xff]
    %v699 = vld [vmem:[#allocation5 + $0x10e0] sm:$0xff]
    %v700 = vld [vmem:[#allocation5 + $0x10e8] sm:$0xff]
    %v701 = vld [vmem:[#allocation5 + $0x10f0] sm:$0xff]
    %v702 = vld [vmem:[#allocation5 + $0x10f8] sm:$0xff]
    %v703 = vld [vmem:[#allocation5 + $0x1100] sm:$0xff]
    %v704 = vld [vmem:[#allocation5 + $0x1108] sm:$0xff]
    %v705 = vld [vmem:[#allocation5 + $0x1110] sm:$0xff]
    %v706 = vld [vmem:[#allocation5 + $0x1118] sm:$0xff]
    %v707 = vld [vmem:[#allocation5 + $0x1120] sm:$0xff]
    %v708 = vld [vmem:[#allocation5 + $0x1128] sm:$0xff]
    %v709 = vld [vmem:[#allocation5 + $0x1130] sm:$0xff]
    %v710 = vld [vmem:[#allocation5 + $0x1138] sm:$0xff]
    %v711 = vld [vmem:[#allocation5 + $0x1140] sm:$0xff]
    %v712 = vld [vmem:[#allocation5 + $0x1148] sm:$0xff]
    %v713 = vld [vmem:[#allocation5 + $0x1150] sm:$0xff]
    %v714 = vld [vmem:[#allocation5 + $0x1158] sm:$0xff]
    %v715 = vld [vmem:[#allocation5 + $0x1160] sm:$0xff]
    %v716 = vld [vmem:[#allocation5 + $0x1168] sm:$0xff]
    %v717 = vld [vmem:[#allocation5 + $0x1170] sm:$0xff]
    %v718 = vld [vmem:[#allocation5 + $0x1178] sm:$0xff]
    %v719 = vld [vmem:[#allocation5 + $0x1180] sm:$0xff]
    %v720 = vld [vmem:[#allocation5 + $0x1188] sm:$0xff]
    %v721 = vld [vmem:[#allocation5 + $0x1190] sm:$0xff]
    %v722 = vld [vmem:[#allocation5 + $0x1198] sm:$0xff]
    %v723 = vld [vmem:[#allocation5 + $0x11a0] sm:$0xff]
    %v724 = vld [vmem:[#allocation5 + $0x11a8] sm:$0xff]
    %v725 = vld [vmem:[#allocation5 + $0x11b0] sm:$0xff]
    %v726 = vld [vmem:[#allocation5 + $0x11b8] sm:$0xff]
    %v727 = vld [vmem:[#allocation5 + $0x11c0] sm:$0xff]
    %v728 = vld [vmem:[#allocation5 + $0x11c8] sm:$0xff]
    %v729 = vld [vmem:[#allocation5 + $0x11d0] sm:$0xff]
    %v730 = vld [vmem:[#allocation5 + $0x11d8] sm:$0xff]
    %v731 = vld [vmem:[#allocation5 + $0x11e0] sm:$0xff]
    %v732 = vld [vmem:[#allocation5 + $0x11e8] sm:$0xff]
    %v733 = vld [vmem:[#allocation5 + $0x11f0] sm:$0xff]
    %v734 = vld [vmem:[#allocation5 + $0x11f8] sm:$0xff]
    %v735 = vld [vmem:[#allocation5 + $0x1200] sm:$0xff]
    %v736 = vld [vmem:[#allocation5 + $0x1208] sm:$0xff]
    %v737 = vld [vmem:[#allocation5 + $0x1210] sm:$0xff]
    %v738 = vld [vmem:[#allocation5 + $0x1218] sm:$0xff]
    %v739 = vld [vmem:[#allocation5 + $0x1220] sm:$0xff]
    %v740 = vld [vmem:[#allocation5 + $0x1228] sm:$0xff]
    %v741 = vld [vmem:[#allocation5 + $0x1230] sm:$0xff]
    %v742 = vld [vmem:[#allocation5 + $0x1238] sm:$0xff]
    %v743 = vld [vmem:[#allocation5 + $0x1240] sm:$0xff]
    %v744 = vld [vmem:[#allocation5 + $0x1248] sm:$0xff]
    %v745 = vld [vmem:[#allocation5 + $0x1250] sm:$0xff]
    %v746 = vld [vmem:[#allocation5 + $0x1258] sm:$0xff]
    %v747 = vld [vmem:[#allocation5 + $0x1260] sm:$0xff]
    %v748 = vld [vmem:[#allocation5 + $0x1268] sm:$0xff]
    %v749 = vld [vmem:[#allocation5 + $0x1270] sm:$0xff]
    %v750 = vld [vmem:[#allocation5 + $0x1278] sm:$0xff]
    %v751 = vld [vmem:[#allocation5 + $0x1280] sm:$0xff]
    %v752 = vld [vmem:[#allocation5 + $0x1288] sm:$0xff]
    %v753 = vld [vmem:[#allocation5 + $0x1290] sm:$0xff]
    %v754 = vld [vmem:[#allocation5 + $0x1298] sm:$0xff]
    %v755 = vld [vmem:[#allocation5 + $0x12a0] sm:$0xff]
    %v756 = vld [vmem:[#allocation5 + $0x12a8] sm:$0xff]
    %v757 = vld [vmem:[#allocation5 + $0x12b0] sm:$0xff]
    %v758 = vld [vmem:[#allocation5 + $0x12b8] sm:$0xff]
    %v759 = vld [vmem:[#allocation5 + $0x12c0] sm:$0xff]
    %v760 = vld [vmem:[#allocation5 + $0x12c8] sm:$0xff]
    %v761 = vld [vmem:[#allocation5 + $0x12d0] sm:$0xff]
    %v762 = vld [vmem:[#allocation5 + $0x12d8] sm:$0xff]
    %v763 = vld [vmem:[#allocation5 + $0x12e0] sm:$0xff]
    %v764 = vld [vmem:[#allocation5 + $0x12e8] sm:$0xff]
    %v765 = vld [vmem:[#allocation5 + $0x12f0] sm:$0xff]
    %v766 = vld [vmem:[#allocation5 + $0x12f8] sm:$0xff]
    %v767 = vld [vmem:[#allocation5 + $0x1300] sm:$0xff]
    %v768 = vld [vmem:[#allocation5 + $0x1308] sm:$0xff]
    %v769 = vld [vmem:[#allocation5 + $0x1310] sm:$0xff]
    %v770 = vld [vmem:[#allocation5 + $0x1318] sm:$0xff]
    %v771 = vld [vmem:[#allocation5 + $0x1320] sm:$0xff]
    %v772 = vld [vmem:[#allocation5 + $0x1328] sm:$0xff]
    %v773 = vld [vmem:[#allocation5 + $0x1330] sm:$0xff]
    %v774 = vld [vmem:[#allocation5 + $0x1338] sm:$0xff]
    %v775 = vld [vmem:[#allocation5 + $0x1340] sm:$0xff]
    %v776 = vld [vmem:[#allocation5 + $0x1348] sm:$0xff]
    %v777 = vld [vmem:[#allocation5 + $0x1350] sm:$0xff]
    %v778 = vld [vmem:[#allocation5 + $0x1358] sm:$0xff]
    %v779 = vld [vmem:[#allocation5 + $0x1360] sm:$0xff]
    %v780 = vld [vmem:[#allocation5 + $0x1368] sm:$0xff]
    %v781 = vld [vmem:[#allocation5 + $0x1370] sm:$0xff]
    %v782 = vld [vmem:[#allocation5 + $0x1378] sm:$0xff]
    %v783 = vld [vmem:[#allocation5 + $0x1380] sm:$0xff]
    %v784 = vld [vmem:[#allocation5 + $0x1388] sm:$0xff]
    %v785 = vld [vmem:[#allocation5 + $0x1390] sm:$0xff]
    %v786 = vld [vmem:[#allocation5 + $0x1398] sm:$0xff]
    %v787 = vld [vmem:[#allocation5 + $0x13a0] sm:$0xff]
    %v788 = vld [vmem:[#allocation5 + $0x13a8] sm:$0xff]
    %v789 = vld [vmem:[#allocation5 + $0x13b0] sm:$0xff]
    %v790 = vld [vmem:[#allocation5 + $0x13b8] sm:$0xff]
    %v791 = vld [vmem:[#allocation5 + $0x13c0] sm:$0xff]
    %v792 = vld [vmem:[#allocation5 + $0x13c8] sm:$0xff]
    %v793 = vld [vmem:[#allocation5 + $0x13d0] sm:$0xff]
    %v794 = vld [vmem:[#allocation5 + $0x13d8] sm:$0xff]
    %v795 = vld [vmem:[#allocation5 + $0x13e0] sm:$0xff]
    %v796 = vld [vmem:[#allocation5 + $0x13e8] sm:$0xff]
    %v797 = vld [vmem:[#allocation5 + $0x13f0] sm:$0xff]
    %v798 = vld [vmem:[#allocation5 + $0x13f8] sm:$0xff]
    %v799 = vld [vmem:[#allocation5 + $0x1400] sm:$0xff]
    %v800 = vld [vmem:[#allocation5 + $0x1408] sm:$0xff]
    %v801 = vld [vmem:[#allocation5 + $0x1410] sm:$0xff]
    %v802 = vld [vmem:[#allocation5 + $0x1418] sm:$0xff]
    %v803 = vld [vmem:[#allocation5 + $0x1420] sm:$0xff]
    %v804 = vld [vmem:[#allocation5 + $0x1428] sm:$0xff]
    %v805 = vld [vmem:[#allocation5 + $0x1430] sm:$0xff]
    %v806 = vld [vmem:[#allocation5 + $0x1438] sm:$0xff]
    %v807 = vld [vmem:[#allocation7] sm:$0x3]
    %v809 = vlaneseq
    %v810 = vshrl.u32 %v809, 7
    %v811 = vsub.s32 0, %v810
    %v812 = vrot.slane %v807, %v811
    %v813 = vlaneseq
    %v814 = vshrl.u32 %v813, 7
    %v815 = vsub.s32 1, %v814
    %v816 = vrot.slane %v807, %v815
    %vm819 = vcmask 261120
    %v821 = vsel %vm819, %v74, 0
    %v824 = vsel %vm819, %v95, 0
    %v827 = vsel %vm819, %v116, 0
    %v830 = vsel %vm819, %v137, 0
    %v833 = vsel %vm819, %v158, 0
    %835 = vmatprep.subr.mxu0 %v160
    %836 = vmatpush1.msra.mxu0 %v159
    %837 = vmatprep.subr.mxu0 %v162
    %838 = vmatpush1.msra.mxu0 %v161
    %839 = vmatprep.subr.mxu0 %v164
    %840 = vmatpush1.msra.mxu0 %v163
    %841 = vmatprep.subr.mxu0 %v166
    %842 = vmatpush1.msra.mxu0 %v165
    %843 = vmatprep.subr.mxu0 %v168
    %844 = vmatpush1.msra.mxu0 %v167
    %845 = vmatprep.subr.mxu0 %v170
    %846 = vmatpush1.msra.mxu0 %v169
    %847 = vmatprep.subr.mxu0 %v172
    %848 = vmatpush1.msra.mxu0 %v171
    %849 = vmatprep.subr.mxu0 %v174
    %850 = vmatpush1.msra.mxu0 %v173
    %851 = vmatprep.subr.mxu0 %v176
    %852 = vmatpush1.msra.mxu0 %v175
    %853 = vmatprep.subr.mxu0 %v178
    %854 = vmatpush1.msra.mxu0 %v177
    %855 = vmatprep.subr.mxu0 %v180
    %856 = vmatpush1.msra.mxu0 %v179
    %857 = vmatprep.subr.mxu0 %v182
    %858 = vmatpush1.msra.mxu0 %v181
    %859 = vmatprep.subr.mxu0 %v184
    %860 = vmatpush1.msra.mxu0 %v183
    %861 = vmatprep.subr.mxu0 %v186
    %862 = vmatpush1.msra.mxu0 %v185
    %863 = vmatprep.subr.mxu0 %v188
    %864 = vmatpush1.msra.mxu0 %v187
    %865 = vmatprep.subr.mxu0 %v190
    %866 = vmatpush1.msra.mxu0 %v189
    %867 = vmatprep.subr.mxu0 %v192
    %868 = vmatpush1.msra.mxu0 %v191
    %869 = vmatprep.subr.mxu0 %v194
    %870 = vmatpush1.msra.mxu0 %v193
    %871 = vmatprep.subr.mxu0 %v196
    %872 = vmatpush1.msra.mxu0 %v195
    %873 = vmatprep.subr.mxu0 %v198
    %874 = vmatpush1.msra.mxu0 %v197
    %875 = vmatprep.subr.mxu0 %v200
    %876 = vmatpush1.msra.mxu0 %v199
    %877 = vmatprep.subr.mxu0 %v202
    %878 = vmatpush1.msra.mxu0 %v201
    %879 = vmatprep.subr.mxu0 %v204
    %880 = vmatpush1.msra.mxu0 %v203
    %881 = vmatprep.subr.mxu0 %v206
    %882 = vmatpush1.msra.mxu0 %v205
    %883 = vmatprep.subr.mxu0 %v208
    %884 = vmatpush1.msra.mxu0 %v207
    %885 = vmatprep.subr.mxu0 %v210
    %886 = vmatpush1.msra.mxu0 %v209
    %887 = vmatprep.subr.mxu0 %v212
    %888 = vmatpush1.msra.mxu0 %v211
    %889 = vmatprep.subr.mxu0 %v214
    %890 = vmatpush1.msra.mxu0 %v213
    %891 = vmatprep.subr.mxu0 %v216
    %892 = vmatpush1.msra.mxu0 %v215
    %893 = vmatprep.subr.mxu0 %v218
    %894 = vmatpush1.msra.mxu0 %v217
    %895 = vmatprep.subr.mxu0 %v220
    %896 = vmatpush1.msra.mxu0 %v219
    %897 = vmatprep.subr.mxu0 %v222
    %898 = vmatpush1.msra.mxu0 %v221
    %899 = vmatprep.mubr.f32.mxu0 %v55
    %900 = vmatmul.mubr.f32.gmra.mrb[0].mxu0 %v54
    %v901 = vpop.f32.mrb[0].mxu0
    %v902 = vadd.f32 %v812, %v901
    %v903 = vpop.f32.mrb[0].mxu0
    %v904 = vadd.f32 %v816, %v903
    %905 = vmatprep.mubr.f32.mxu0 %v76
    %906 = vmatmul.mubr.f32.gmra.mrb[0].mxu0 %v75
    %v907 = vpop.f32.mrb[0].mxu0
    %v908 = vadd.f32 %v812, %v907
    %v909 = vpop.f32.mrb[0].mxu0
    %v910 = vadd.f32 %v816, %v909
    %911 = vmatprep.mubr.f32.mxu0 %v97
    %912 = vmatmul.mubr.f32.gmra.mrb[0].mxu0 %v96
    %v913 = vpop.f32.mrb[0].mxu0
    %v914 = vadd.f32 %v812, %v913
    %v915 = vpop.f32.mrb[0].mxu0
    %v916 = vadd.f32 %v816, %v915
    %917 = vmatprep.mubr.f32.mxu0 %v118
    %918 = vmatmul.mubr.f32.gmra.mrb[0].mxu0 %v117
    %v919 = vpop.f32.mrb[0].mxu0
    %v920 = vadd.f32 %v812, %v919
    %v921 = vpop.f32.mrb[0].mxu0
    %v922 = vadd.f32 %v816, %v921
    %923 = vmatprep.mubr.f32.mxu0 %v139
    %924 = vmatmul.mubr.f32.gmra.mrb[0].mxu0 %v138
    %v925 = vpop.f32.mrb[0].mxu0
    %v926 = vadd.f32 %v812, %v925
    %v927 = vpop.f32.mrb[0].mxu0
    %v928 = vadd.f32 %v816, %v927
    %929 = vdwg.mxu0
    %930 = vmatprep.subr.mxu0 %v224
    %931 = vmatpush1.msra.mxu0 %v223
    %932 = vmatprep.subr.mxu0 %v226
    %933 = vmatpush1.msra.mxu0 %v225
    %934 = vmatprep.subr.mxu0 %v228
    %935 = vmatpush1.msra.mxu0 %v227
    %936 = vmatprep.subr.mxu0 %v230
    %937 = vmatpush1.msra.mxu0 %v229
    %938 = vmatprep.subr.mxu0 %v232
    %939 = vmatpush1.msra.mxu0 %v231
    %940 = vmatprep.subr.mxu0 %v234
    %941 = vmatpush1.msra.mxu0 %v233
    %942 = vmatprep.subr.mxu0 %v236
    %943 = vmatpush1.msra.mxu0 %v235
    %944 = vmatprep.subr.mxu0 %v238
    %945 = vmatpush1.msra.mxu0 %v237
    %946 = vmatprep.subr.mxu0 %v240
    %947 = vmatpush1.msra.mxu0 %v239
    %948 = vmatprep.subr.mxu0 %v242
    %949 = vmatpush1.msra.mxu0 %v241
    %950 = vmatprep.subr.mxu0 %v244
    %951 = vmatpush1.msra.mxu0 %v243
    %952 = vmatprep.subr.mxu0 %v246
    %953 = vmatpush1.msra.mxu0 %v245
    %954 = vmatprep.subr.mxu0 %v248
    %955 = vmatpush1.msra.mxu0 %v247
    %956 = vmatprep.subr.mxu0 %v250
    %957 = vmatpush1.msra.mxu0 %v249
    %958 = vmatprep.subr.mxu0 %v252
    %959 = vmatpush1.msra.mxu0 %v251
    %960 = vmatprep.subr.mxu0 %v254
    %961 = vmatpush1.msra.mxu0 %v253
    %962 = vmatprep.subr.mxu0 %v256
    %963 = vmatpush1.msra.mxu0 %v255
    %964 = vmatprep.subr.mxu0 %v258
    %965 = vmatpush1.msra.mxu0 %v257
    %966 = vmatprep.subr.mxu0 %v260
    %967 = vmatpush1.msra.mxu0 %v259
    %968 = vmatprep.subr.mxu0 %v262
    %969 = vmatpush1.msra.mxu0 %v261
    %970 = vmatprep.subr.mxu0 %v264
    %971 = vmatpush1.msra.mxu0 %v263
    %972 = vmatprep.subr.mxu0 %v266
    %973 = vmatpush1.msra.mxu0 %v265
    %974 = vmatprep.subr.mxu0 %v268
    %975 = vmatpush1.msra.mxu0 %v267
    %976 = vmatprep.subr.mxu0 %v270
    %977 = vmatpush1.msra.mxu0 %v269
    %978 = vmatprep.subr.mxu0 %v272
    %979 = vmatpush1.msra.mxu0 %v271
    %980 = vmatprep.subr.mxu0 %v274
    %981 = vmatpush1.msra.mxu0 %v273
    %982 = vmatprep.subr.mxu0 %v276
    %983 = vmatpush1.msra.mxu0 %v275
    %984 = vmatprep.subr.mxu0 %v278
    %985 = vmatpush1.msra.mxu0 %v277
    %986 = vmatprep.subr.mxu0 %v280
    %987 = vmatpush1.msra.mxu0 %v279
    %988 = vmatprep.subr.mxu0 %v282
    %989 = vmatpush1.msra.mxu0 %v281
    %990 = vmatprep.subr.mxu0 %v284
    %991 = vmatpush1.msra.mxu0 %v283
    %992 = vmatprep.subr.mxu0 %v286
    %993 = vmatpush1.msra.mxu0 %v285
    %994 = vmatprep.mubr.f32.mxu0 %v57
    %995 = vmatmul.mubr.f32.gmra.mrb[0].mxu0 %v56
    %v996 = vpop.f32.mrb[0].mxu0
    %v997 = vadd.f32 %v902, %v996
    %v998 = vpop.f32.mrb[0].mxu0
    %v999 = vadd.f32 %v904, %v998
    %1000 = vmatprep.mubr.f32.mxu0 %v78
    %1001 = vmatmul.mubr.f32.gmra.mrb[0].mxu0 %v77
    %v1002 = vpop.f32.mrb[0].mxu0
    %v1003 = vadd.f32 %v908, %v1002
    %v1004 = vpop.f32.mrb[0].mxu0
    %v1005 = vadd.f32 %v910, %v1004
    %1006 = vmatprep.mubr.f32.mxu0 %v99
    %1007 = vmatmul.mubr.f32.gmra.mrb[0].mxu0 %v98
    %v1008 = vpop.f32.mrb[0].mxu0
    %v1009 = vadd.f32 %v914, %v1008
    %v1010 = vpop.f32.mrb[0].mxu0
    %v1011 = vadd.f32 %v916, %v1010
    %1012 = vmatprep.mubr.f32.mxu0 %v120
    %1013 = vmatmul.mubr.f32.gmra.mrb[0].mxu0 %v119
    %v1014 = vpop.f32.mrb[0].mxu0
    %v1015 = vadd.f32 %v920, %v1014
    %v1016 = vpop.f32.mrb[0].mxu0
    %v1017 = vadd.f32 %v922, %v1016
    %1018 = vmatprep.mubr.f32.mxu0 %v141
    %1019 = vmatmul.mubr.f32.gmra.mrb[0].mxu0 %v140
    %v1020 = vpop.f32.mrb[0].mxu0
    %v1021 = vadd.f32 %v926, %v1020
    %v1022 = vpop.f32.mrb[0].mxu0
    %v1023 = vadd.f32 %v928, %v1022
    %1024 = vdwg.mxu0
    %1025 = vmatprep.subr.mxu0 %v288
    %1026 = vmatpush1.msra.mxu0 %v287
    %1027 = vmatprep.subr.mxu0 %v290
    %1028 = vmatpush1.msra.mxu0 %v289
    %1029 = vmatprep.subr.mxu0 %v292
    %1030 = vmatpush1.msra.mxu0 %v291
    %1031 = vmatprep.subr.mxu0 %v294
    %1032 = vmatpush1.msra.mxu0 %v293
    %1033 = vmatprep.subr.mxu0 %v296
    %1034 = vmatpush1.msra.mxu0 %v295
    %1035 = vmatprep.subr.mxu0 %v298
    %1036 = vmatpush1.msra.mxu0 %v297
    %1037 = vmatprep.subr.mxu0 %v300
    %1038 = vmatpush1.msra.mxu0 %v299
    %1039 = vmatprep.subr.mxu0 %v302
    %1040 = vmatpush1.msra.mxu0 %v301
    %1041 = vmatprep.subr.mxu0 %v304
    %1042 = vmatpush1.msra.mxu0 %v303
    %1043 = vmatprep.subr.mxu0 %v306
    %1044 = vmatpush1.msra.mxu0 %v305
    %1045 = vmatprep.subr.mxu0 %v308
    %1046 = vmatpush1.msra.mxu0 %v307
    %1047 = vmatprep.subr.mxu0 %v310
    %1048 = vmatpush1.msra.mxu0 %v309
    %1049 = vmatprep.subr.mxu0 %v312
    %1050 = vmatpush1.msra.mxu0 %v311
    %1051 = vmatprep.subr.mxu0 %v314
    %1052 = vmatpush1.msra.mxu0 %v313
    %1053 = vmatprep.subr.mxu0 %v316
    %1054 = vmatpush1.msra.mxu0 %v315
    %1055 = vmatprep.subr.mxu0 %v318
    %1056 = vmatpush1.msra.mxu0 %v317
    %1057 = vmatprep.subr.mxu0 %v320
    %1058 = vmatpush1.msra.mxu0 %v319
    %1059 = vmatprep.subr.mxu0 %v322
    %1060 = vmatpush1.msra.mxu0 %v321
    %1061 = vmatprep.subr.mxu0 %v324
    %1062 = vmatpush1.msra.mxu0 %v323
    %1063 = vmatprep.subr.mxu0 %v326
    %1064 = vmatpush1.msra.mxu0 %v325
    %1065 = vmatprep.subr.mxu0 %v328
    %1066 = vmatpush1.msra.mxu0 %v327
    %1067 = vmatprep.subr.mxu0 %v330
    %1068 = vmatpush1.msra.mxu0 %v329
    %1069 = vmatprep.subr.mxu0 %v332
    %1070 = vmatpush1.msra.mxu0 %v331
    %1071 = vmatprep.subr.mxu0 %v334
    %1072 = vmatpush1.msra.mxu0 %v333
    %1073 = vmatprep.subr.mxu0 %v336
    %1074 = vmatpush1.msra.mxu0 %v335
    %1075 = vmatprep.subr.mxu0 %v338
    %1076 = vmatpush1.msra.mxu0 %v337
    %1077 = vmatprep.subr.mxu0 %v340
    %1078 = vmatpush1.msra.mxu0 %v339
    %1079 = vmatprep.subr.mxu0 %v342
    %1080 = vmatpush1.msra.mxu0 %v341
    %1081 = vmatprep.subr.mxu0 %v344
    %1082 = vmatpush1.msra.mxu0 %v343
    %1083 = vmatprep.subr.mxu0 %v346
    %1084 = vmatpush1.msra.mxu0 %v345
    %1085 = vmatprep.subr.mxu0 %v348
    %1086 = vmatpush1.msra.mxu0 %v347
    %1087 = vmatprep.subr.mxu0 %v350
    %1088 = vmatpush1.msra.mxu0 %v349
    %1089 = vmatprep.mubr.f32.mxu0 %v59
    %1090 = vmatmul.mubr.f32.gmra.mrb[0].mxu0 %v58
    %v1091 = vpop.f32.mrb[0].mxu0
    %v1092 = vadd.f32 %v997, %v1091
    %v1093 = vpop.f32.mrb[0].mxu0
    %v1094 = vadd.f32 %v999, %v1093
    %1095 = vmatprep.mubr.f32.mxu0 %v80
    %1096 = vmatmul.mubr.f32.gmra.mrb[0].mxu0 %v79
    %v1097 = vpop.f32.mrb[0].mxu0
    %v1098 = vadd.f32 %v1003, %v1097
    %v1099 = vpop.f32.mrb[0].mxu0
    %v1100 = vadd.f32 %v1005, %v1099
    %1101 = vmatprep.mubr.f32.mxu0 %v101
    %1102 = vmatmul.mubr.f32.gmra.mrb[0].mxu0 %v100
    %v1103 = vpop.f32.mrb[0].mxu0
    %v1104 = vadd.f32 %v1009, %v1103
    %v1105 = vpop.f32.mrb[0].mxu0
    %v1106 = vadd.f32 %v1011, %v1105
    %1107 = vmatprep.mubr.f32.mxu0 %v122
    %1108 = vmatmul.mubr.f32.gmra.mrb[0].mxu0 %v121
    %v1109 = vpop.f32.mrb[0].mxu0
    %v1110 = vadd.f32 %v1015, %v1109
    %v1111 = vpop.f32.mrb[0].mxu0
    %v1112 = vadd.f32 %v1017, %v1111
    %1113 = vmatprep.mubr.f32.mxu0 %v143
    %1114 = vmatmul.mubr.f32.gmra.mrb[0].mxu0 %v142
    %v1115 = vpop.f32.mrb[0].mxu0
    %v1116 = vadd.f32 %v1021, %v1115
    %v1117 = vpop.f32.mrb[0].mxu0
    %v1118 = vadd.f32 %v1023, %v1117
    %1119 = vdwg.mxu0
    %1120 = vmatprep.subr.mxu0 %v352
    %1121 = vmatpush1.msra.mxu0 %v351
    %1122 = vmatprep.subr.mxu0 %v354
    %1123 = vmatpush1.msra.mxu0 %v353
    %1124 = vmatprep.subr.mxu0 %v356
    %1125 = vmatpush1.msra.mxu0 %v355
    %1126 = vmatprep.subr.mxu0 %v358
    %1127 = vmatpush1.msra.mxu0 %v357
    %1128 = vmatprep.subr.mxu0 %v360
    %1129 = vmatpush1.msra.mxu0 %v359
    %1130 = vmatprep.subr.mxu0 %v362
    %1131 = vmatpush1.msra.mxu0 %v361
    %1132 = vmatprep.subr.mxu0 %v364
    %1133 = vmatpush1.msra.mxu0 %v363
    %1134 = vmatprep.subr.mxu0 %v366
    %1135 = vmatpush1.msra.mxu0 %v365
    %1136 = vmatprep.subr.mxu0 %v368
    %1137 = vmatpush1.msra.mxu0 %v367
    %1138 = vmatprep.subr.mxu0 %v370
    %1139 = vmatpush1.msra.mxu0 %v369
    %1140 = vmatprep.subr.mxu0 %v372
    %1141 = vmatpush1.msra.mxu0 %v371
    %1142 = vmatprep.subr.mxu0 %v374
    %1143 = vmatpush1.msra.mxu0 %v373
    %1144 = vmatprep.subr.mxu0 %v376
    %1145 = vmatpush1.msra.mxu0 %v375
    %1146 = vmatprep.subr.mxu0 %v378
    %1147 = vmatpush1.msra.mxu0 %v377
    %1148 = vmatprep.subr.mxu0 %v380
    %1149 = vmatpush1.msra.mxu0 %v379
    %1150 = vmatprep.subr.mxu0 %v382
    %1151 = vmatpush1.msra.mxu0 %v381
    %1152 = vmatprep.subr.mxu0 %v384
    %1153 = vmatpush1.msra.mxu0 %v383
    %1154 = vmatprep.subr.mxu0 %v386
    %1155 = vmatpush1.msra.mxu0 %v385
    %1156 = vmatprep.subr.mxu0 %v388
    %1157 = vmatpush1.msra.mxu0 %v387
    %1158 = vmatprep.subr.mxu0 %v390
    %1159 = vmatpush1.msra.mxu0 %v389
    %1160 = vmatprep.subr.mxu0 %v392
    %1161 = vmatpush1.msra.mxu0 %v391
    %1162 = vmatprep.subr.mxu0 %v394
    %1163 = vmatpush1.msra.mxu0 %v393
    %1164 = vmatprep.subr.mxu0 %v396
    %1165 = vmatpush1.msra.mxu0 %v395
    %1166 = vmatprep.subr.mxu0 %v398
    %1167 = vmatpush1.msra.mxu0 %v397
    %1168 = vmatprep.subr.mxu0 %v400
    %1169 = vmatpush1.msra.mxu0 %v399
    %1170 = vmatprep.subr.mxu0 %v402
    %1171 = vmatpush1.msra.mxu0 %v401
    %1172 = vmatprep.subr.mxu0 %v404
    %1173 = vmatpush1.msra.mxu0 %v403
    %1174 = vmatprep.subr.mxu0 %v406
    %1175 = vmatpush1.msra.mxu0 %v405
    %1176 = vmatprep.subr.mxu0 %v408
    %1177 = vmatpush1.msra.mxu0 %v407
    %1178 = vmatprep.subr.mxu0 %v410
    %1179 = vmatpush1.msra.mxu0 %v409
    %1180 = vmatprep.subr.mxu0 %v412
    %1181 = vmatpush1.msra.mxu0 %v411
    %1182 = vmatprep.subr.mxu0 %v414
    %1183 = vmatpush1.msra.mxu0 %v413
    %1184 = vmatprep.mubr.f32.mxu0 %v61
    %1185 = vmatmul.mubr.f32.gmra.mrb[0].mxu0 %v60
    %v1186 = vpop.f32.mrb[0].mxu0
    %v1187 = vadd.f32 %v1092, %v1186
    %v1188 = vpop.f32.mrb[0].mxu0
    %v1189 = vadd.f32 %v1094, %v1188
    %1190 = vmatprep.mubr.f32.mxu0 %v82
    %1191 = vmatmul.mubr.f32.gmra.mrb[0].mxu0 %v81
    %v1192 = vpop.f32.mrb[0].mxu0
    %v1193 = vadd.f32 %v1098, %v1192
    %v1194 = vpop.f32.mrb[0].mxu0
    %v1195 = vadd.f32 %v1100, %v1194
    %1196 = vmatprep.mubr.f32.mxu0 %v103
    %1197 = vmatmul.mubr.f32.gmra.mrb[0].mxu0 %v102
    %v1198 = vpop.f32.mrb[0].mxu0
    %v1199 = vadd.f32 %v1104, %v1198
    %v1200 = vpop.f32.mrb[0].mxu0
    %v1201 = vadd.f32 %v1106, %v1200
    %1202 = vmatprep.mubr.f32.mxu0 %v124
    %1203 = vmatmul.mubr.f32.gmra.mrb[0].mxu0 %v123
    %v1204 = vpop.f32.mrb[0].mxu0
    %v1205 = vadd.f32 %v1110, %v1204
    %v1206 = vpop.f32.mrb[0].mxu0
    %v1207 = vadd.f32 %v1112, %v1206
    %1208 = vmatprep.mubr.f32.mxu0 %v145
    %1209 = vmatmul.mubr.f32.gmra.mrb[0].mxu0 %v144
    %v1210 = vpop.f32.mrb[0].mxu0
    %v1211 = vadd.f32 %v1116, %v1210
    %v1212 = vpop.f32.mrb[0].mxu0
    %v1213 = vadd.f32 %v1118, %v1212
    %1214 = vdwg.mxu0
    %1215 = vmatprep.subr.mxu0 %v416
    %1216 = vmatpush1.msra.mxu0 %v415
    %1217 = vmatprep.subr.mxu0 %v418
    %1218 = vmatpush1.msra.mxu0 %v417
    %1219 = vmatprep.subr.mxu0 %v420
    %1220 = vmatpush1.msra.mxu0 %v419
    %1221 = vmatprep.subr.mxu0 %v422
    %1222 = vmatpush1.msra.mxu0 %v421
    %1223 = vmatprep.subr.mxu0 %v424
    %1224 = vmatpush1.msra.mxu0 %v423
    %1225 = vmatprep.subr.mxu0 %v426
    %1226 = vmatpush1.msra.mxu0 %v425
    %1227 = vmatprep.subr.mxu0 %v428
    %1228 = vmatpush1.msra.mxu0 %v427
    %1229 = vmatprep.subr.mxu0 %v430
    %1230 = vmatpush1.msra.mxu0 %v429
    %1231 = vmatprep.subr.mxu0 %v432
    %1232 = vmatpush1.msra.mxu0 %v431
    %1233 = vmatprep.subr.mxu0 %v434
    %1234 = vmatpush1.msra.mxu0 %v433
    %1235 = vmatprep.subr.mxu0 %v436
    %1236 = vmatpush1.msra.mxu0 %v435
    %1237 = vmatprep.subr.mxu0 %v438
    %1238 = vmatpush1.msra.mxu0 %v437
    %1239 = vmatprep.subr.mxu0 %v440
    %1240 = vmatpush1.msra.mxu0 %v439
    %1241 = vmatprep.subr.mxu0 %v442
    %1242 = vmatpush1.msra.mxu0 %v441
    %1243 = vmatprep.subr.mxu0 %v444
    %1244 = vmatpush1.msra.mxu0 %v443
    %1245 = vmatprep.subr.mxu0 %v446
    %1246 = vmatpush1.msra.mxu0 %v445
    %1247 = vmatprep.subr.mxu0 %v448
    %1248 = vmatpush1.msra.mxu0 %v447
    %1249 = vmatprep.subr.mxu0 %v450
    %1250 = vmatpush1.msra.mxu0 %v449
    %1251 = vmatprep.subr.mxu0 %v452
    %1252 = vmatpush1.msra.mxu0 %v451
    %1253 = vmatprep.subr.mxu0 %v454
    %1254 = vmatpush1.msra.mxu0 %v453
    %1255 = vmatprep.subr.mxu0 %v456
    %1256 = vmatpush1.msra.mxu0 %v455
    %1257 = vmatprep.subr.mxu0 %v458
    %1258 = vmatpush1.msra.mxu0 %v457
    %1259 = vmatprep.subr.mxu0 %v460
    %1260 = vmatpush1.msra.mxu0 %v459
    %1261 = vmatprep.subr.mxu0 %v462
    %1262 = vmatpush1.msra.mxu0 %v461
    %1263 = vmatprep.subr.mxu0 %v464
    %1264 = vmatpush1.msra.mxu0 %v463
    %1265 = vmatprep.subr.mxu0 %v466
    %1266 = vmatpush1.msra.mxu0 %v465
    %1267 = vmatprep.subr.mxu0 %v468
    %1268 = vmatpush1.msra.mxu0 %v467
    %1269 = vmatprep.subr.mxu0 %v470
    %1270 = vmatpush1.msra.mxu0 %v469
    %1271 = vmatprep.subr.mxu0 %v472
    %1272 = vmatpush1.msra.mxu0 %v471
    %1273 = vmatprep.subr.mxu0 %v474
    %1274 = vmatpush1.msra.mxu0 %v473
    %1275 = vmatprep.subr.mxu0 %v476
    %1276 = vmatpush1.msra.mxu0 %v475
    %1277 = vmatprep.subr.mxu0 %v478
    %1278 = vmatpush1.msra.mxu0 %v477
    %1279 = vmatprep.mubr.f32.mxu0 %v63
    %1280 = vmatmul.mubr.f32.gmra.mrb[0].mxu0 %v62
    %v1281 = vpop.f32.mrb[0].mxu0
    %v1282 = vadd.f32 %v1187, %v1281
    %v1283 = vpop.f32.mrb[0].mxu0
    %v1284 = vadd.f32 %v1189, %v1283
    %1285 = vmatprep.mubr.f32.mxu0 %v84
    %1286 = vmatmul.mubr.f32.gmra.mrb[0].mxu0 %v83
    %v1287 = vpop.f32.mrb[0].mxu0
    %v1288 = vadd.f32 %v1193, %v1287
    %v1289 = vpop.f32.mrb[0].mxu0
    %v1290 = vadd.f32 %v1195, %v1289
    %1291 = vmatprep.mubr.f32.mxu0 %v105
    %1292 = vmatmul.mubr.f32.gmra.mrb[0].mxu0 %v104
    %v1293 = vpop.f32.mrb[0].mxu0
    %v1294 = vadd.f32 %v1199, %v1293
    %v1295 = vpop.f32.mrb[0].mxu0
    %v1296 = vadd.f32 %v1201, %v1295
    %1297 = vmatprep.mubr.f32.mxu0 %v126
    %1298 = vmatmul.mubr.f32.gmra.mrb[0].mxu0 %v125
    %v1299 = vpop.f32.mrb[0].mxu0
    %v1300 = vadd.f32 %v1205, %v1299
    %v1301 = vpop.f32.mrb[0].mxu0
    %v1302 = vadd.f32 %v1207, %v1301
    %1303 = vmatprep.mubr.f32.mxu0 %v147
    %1304 = vmatmul.mubr.f32.gmra.mrb[0].mxu0 %v146
    %v1305 = vpop.f32.mrb[0].mxu0
    %v1306 = vadd.f32 %v1211, %v1305
    %v1307 = vpop.f32.mrb[0].mxu0
    %v1308 = vadd.f32 %v1213, %v1307
    %1309 = vdwg.mxu0
    %1310 = vmatprep.subr.mxu0 %v480
    %1311 = vmatpush1.msra.mxu0 %v479
    %1312 = vmatprep.subr.mxu0 %v482
    %1313 = vmatpush1.msra.mxu0 %v481
    %1314 = vmatprep.subr.mxu0 %v484
    %1315 = vmatpush1.msra.mxu0 %v483
    %1316 = vmatprep.subr.mxu0 %v486
    %1317 = vmatpush1.msra.mxu0 %v485
    %1318 = vmatprep.subr.mxu0 %v488
    %1319 = vmatpush1.msra.mxu0 %v487
    %1320 = vmatprep.subr.mxu0 %v490
    %1321 = vmatpush1.msra.mxu0 %v489
    %1322 = vmatprep.subr.mxu0 %v492
    %1323 = vmatpush1.msra.mxu0 %v491
    %1324 = vmatprep.subr.mxu0 %v494
    %1325 = vmatpush1.msra.mxu0 %v493
    %1326 = vmatprep.subr.mxu0 %v496
    %1327 = vmatpush1.msra.mxu0 %v495
    %1328 = vmatprep.subr.mxu0 %v498
    %1329 = vmatpush1.msra.mxu0 %v497
    %1330 = vmatprep.subr.mxu0 %v500
    %1331 = vmatpush1.msra.mxu0 %v499
    %1332 = vmatprep.subr.mxu0 %v502
    %1333 = vmatpush1.msra.mxu0 %v501
    %1334 = vmatprep.subr.mxu0 %v504
    %1335 = vmatpush1.msra.mxu0 %v503
    %1336 = vmatprep.subr.mxu0 %v506
    %1337 = vmatpush1.msra.mxu0 %v505
    %1338 = vmatprep.subr.mxu0 %v508
    %1339 = vmatpush1.msra.mxu0 %v507
    %1340 = vmatprep.subr.mxu0 %v510
    %1341 = vmatpush1.msra.mxu0 %v509
    %1342 = vmatprep.subr.mxu0 %v512
    %1343 = vmatpush1.msra.mxu0 %v511
    %1344 = vmatprep.subr.mxu0 %v514
    %1345 = vmatpush1.msra.mxu0 %v513
    %1346 = vmatprep.subr.mxu0 %v516
    %1347 = vmatpush1.msra.mxu0 %v515
    %1348 = vmatprep.subr.mxu0 %v518
    %1349 = vmatpush1.msra.mxu0 %v517
    %1350 = vmatprep.subr.mxu0 %v520
    %1351 = vmatpush1.msra.mxu0 %v519
    %1352 = vmatprep.subr.mxu0 %v522
    %1353 = vmatpush1.msra.mxu0 %v521
    %1354 = vmatprep.subr.mxu0 %v524
    %1355 = vmatpush1.msra.mxu0 %v523
    %1356 = vmatprep.subr.mxu0 %v526
    %1357 = vmatpush1.msra.mxu0 %v525
    %1358 = vmatprep.subr.mxu0 %v528
    %1359 = vmatpush1.msra.mxu0 %v527
    %1360 = vmatprep.subr.mxu0 %v530
    %1361 = vmatpush1.msra.mxu0 %v529
    %1362 = vmatprep.subr.mxu0 %v532
    %1363 = vmatpush1.msra.mxu0 %v531
    %1364 = vmatprep.subr.mxu0 %v534
    %1365 = vmatpush1.msra.mxu0 %v533
    %1366 = vmatprep.subr.mxu0 %v536
    %1367 = vmatpush1.msra.mxu0 %v535
    %1368 = vmatprep.subr.mxu0 %v538
    %1369 = vmatpush1.msra.mxu0 %v537
    %1370 = vmatprep.subr.mxu0 %v540
    %1371 = vmatpush1.msra.mxu0 %v539
    %1372 = vmatprep.subr.mxu0 %v542
    %1373 = vmatpush1.msra.mxu0 %v541
    %1374 = vmatprep.mubr.f32.mxu0 %v65
    %1375 = vmatmul.mubr.f32.gmra.mrb[0].mxu0 %v64
    %v1376 = vpop.f32.mrb[0].mxu0
    %v1377 = vadd.f32 %v1282, %v1376
    %v1378 = vpop.f32.mrb[0].mxu0
    %v1379 = vadd.f32 %v1284, %v1378
    %1380 = vmatprep.mubr.f32.mxu0 %v86
    %1381 = vmatmul.mubr.f32.gmra.mrb[0].mxu0 %v85
    %v1382 = vpop.f32.mrb[0].mxu0
    %v1383 = vadd.f32 %v1288, %v1382
    %v1384 = vpop.f32.mrb[0].mxu0
    %v1385 = vadd.f32 %v1290, %v1384
    %1386 = vmatprep.mubr.f32.mxu0 %v107
    %1387 = vmatmul.mubr.f32.gmra.mrb[0].mxu0 %v106
    %v1388 = vpop.f32.mrb[0].mxu0
    %v1389 = vadd.f32 %v1294, %v1388
    %v1390 = vpop.f32.mrb[0].mxu0
    %v1391 = vadd.f32 %v1296, %v1390
    %1392 = vmatprep.mubr.f32.mxu0 %v128
    %1393 = vmatmul.mubr.f32.gmra.mrb[0].mxu0 %v127
    %v1394 = vpop.f32.mrb[0].mxu0
    %v1395 = vadd.f32 %v1300, %v1394
    %v1396 = vpop.f32.mrb[0].mxu0
    %v1397 = vadd.f32 %v1302, %v1396
    %1398 = vmatprep.mubr.f32.mxu0 %v149
    %1399 = vmatmul.mubr.f32.gmra.mrb[0].mxu0 %v148
    %v1400 = vpop.f32.mrb[0].mxu0
    %v1401 = vadd.f32 %v1306, %v1400
    %v1402 = vpop.f32.mrb[0].mxu0
    %v1403 = vadd.f32 %v1308, %v1402
    %1404 = vdwg.mxu0
    %1405 = vmatprep.subr.mxu0 %v544
    %1406 = vmatpush1.msra.mxu0 %v543
    %1407 = vmatprep.subr.mxu0 %v546
    %1408 = vmatpush1.msra.mxu0 %v545
    %1409 = vmatprep.subr.mxu0 %v548
    %1410 = vmatpush1.msra.mxu0 %v547
    %1411 = vmatprep.subr.mxu0 %v550
    %1412 = vmatpush1.msra.mxu0 %v549
    %1413 = vmatprep.subr.mxu0 %v552
    %1414 = vmatpush1.msra.mxu0 %v551
    %1415 = vmatprep.subr.mxu0 %v554
    %1416 = vmatpush1.msra.mxu0 %v553
    %1417 = vmatprep.subr.mxu0 %v556
    %1418 = vmatpush1.msra.mxu0 %v555
    %1419 = vmatprep.subr.mxu0 %v558
    %1420 = vmatpush1.msra.mxu0 %v557
    %1421 = vmatprep.subr.mxu0 %v560
    %1422 = vmatpush1.msra.mxu0 %v559
    %1423 = vmatprep.subr.mxu0 %v562
    %1424 = vmatpush1.msra.mxu0 %v561
    %1425 = vmatprep.subr.mxu0 %v564
    %1426 = vmatpush1.msra.mxu0 %v563
    %1427 = vmatprep.subr.mxu0 %v566
    %1428 = vmatpush1.msra.mxu0 %v565
    %1429 = vmatprep.subr.mxu0 %v568
    %1430 = vmatpush1.msra.mxu0 %v567
    %1431 = vmatprep.subr.mxu0 %v570
    %1432 = vmatpush1.msra.mxu0 %v569
    %1433 = vmatprep.subr.mxu0 %v572
    %1434 = vmatpush1.msra.mxu0 %v571
    %1435 = vmatprep.subr.mxu0 %v574
    %1436 = vmatpush1.msra.mxu0 %v573
    %1437 = vmatprep.subr.mxu0 %v576
    %1438 = vmatpush1.msra.mxu0 %v575
    %1439 = vmatprep.subr.mxu0 %v578
    %1440 = vmatpush1.msra.mxu0 %v577
    %1441 = vmatprep.subr.mxu0 %v580
    %1442 = vmatpush1.msra.mxu0 %v579
    %1443 = vmatprep.subr.mxu0 %v582
    %1444 = vmatpush1.msra.mxu0 %v581
    %1445 = vmatprep.subr.mxu0 %v584
    %1446 = vmatpush1.msra.mxu0 %v583
    %1447 = vmatprep.subr.mxu0 %v586
    %1448 = vmatpush1.msra.mxu0 %v585
    %1449 = vmatprep.subr.mxu0 %v588
    %1450 = vmatpush1.msra.mxu0 %v587
    %1451 = vmatprep.subr.mxu0 %v590
    %1452 = vmatpush1.msra.mxu0 %v589
    %1453 = vmatprep.subr.mxu0 %v592
    %1454 = vmatpush1.msra.mxu0 %v591
    %1455 = vmatprep.subr.mxu0 %v594
    %1456 = vmatpush1.msra.mxu0 %v593
    %1457 = vmatprep.subr.mxu0 %v596
    %1458 = vmatpush1.msra.mxu0 %v595
    %1459 = vmatprep.subr.mxu0 %v598
    %1460 = vmatpush1.msra.mxu0 %v597
    %1461 = vmatprep.subr.mxu0 %v600
    %1462 = vmatpush1.msra.mxu0 %v599
    %1463 = vmatprep.subr.mxu0 %v602
    %1464 = vmatpush1.msra.mxu0 %v601
    %1465 = vmatprep.subr.mxu0 %v604
    %1466 = vmatpush1.msra.mxu0 %v603
    %1467 = vmatprep.subr.mxu0 %v606
    %1468 = vmatpush1.msra.mxu0 %v605
    %1469 = vmatprep.mubr.f32.mxu0 %v67
    %1470 = vmatmul.mubr.f32.gmra.mrb[0].mxu0 %v66
    %v1471 = vpop.f32.mrb[0].mxu0
    %v1472 = vadd.f32 %v1377, %v1471
    %v1473 = vpop.f32.mrb[0].mxu0
    %v1474 = vadd.f32 %v1379, %v1473
    %1475 = vmatprep.mubr.f32.mxu0 %v88
    %1476 = vmatmul.mubr.f32.gmra.mrb[0].mxu0 %v87
    %v1477 = vpop.f32.mrb[0].mxu0
    %v1478 = vadd.f32 %v1383, %v1477
    %v1479 = vpop.f32.mrb[0].mxu0
    %v1480 = vadd.f32 %v1385, %v1479
    %1481 = vmatprep.mubr.f32.mxu0 %v109
    %1482 = vmatmul.mubr.f32.gmra.mrb[0].mxu0 %v108
    %v1483 = vpop.f32.mrb[0].mxu0
    %v1484 = vadd.f32 %v1389, %v1483
    %v1485 = vpop.f32.mrb[0].mxu0
    %v1486 = vadd.f32 %v1391, %v1485
    %1487 = vmatprep.mubr.f32.mxu0 %v130
    %1488 = vmatmul.mubr.f32.gmra.mrb[0].mxu0 %v129
    %v1489 = vpop.f32.mrb[0].mxu0
    %v1490 = vadd.f32 %v1395, %v1489
    %v1491 = vpop.f32.mrb[0].mxu0
    %v1492 = vadd.f32 %v1397, %v1491
    %1493 = vmatprep.mubr.f32.mxu0 %v151
    %1494 = vmatmul.mubr.f32.gmra.mrb[0].mxu0 %v150
    %v1495 = vpop.f32.mrb[0].mxu0
    %v1496 = vadd.f32 %v1401, %v1495
    %v1497 = vpop.f32.mrb[0].mxu0
    %v1498 = vadd.f32 %v1403, %v1497
    %1499 = vdwg.mxu0
    %1500 = vmatprep.subr.mxu0 %v608
    %1501 = vmatpush1.msra.mxu0 %v607
    %1502 = vmatprep.subr.mxu0 %v610
    %1503 = vmatpush1.msra.mxu0 %v609
    %1504 = vmatprep.subr.mxu0 %v612
    %1505 = vmatpush1.msra.mxu0 %v611
    %1506 = vmatprep.subr.mxu0 %v614
    %1507 = vmatpush1.msra.mxu0 %v613
    %1508 = vmatprep.subr.mxu0 %v616
    %1509 = vmatpush1.msra.mxu0 %v615
    %1510 = vmatprep.subr.mxu0 %v618
    %1511 = vmatpush1.msra.mxu0 %v617
    %1512 = vmatprep.subr.mxu0 %v620
    %1513 = vmatpush1.msra.mxu0 %v619
    %1514 = vmatprep.subr.mxu0 %v622
    %1515 = vmatpush1.msra.mxu0 %v621
    %1516 = vmatprep.subr.mxu0 %v624
    %1517 = vmatpush1.msra.mxu0 %v623
    %1518 = vmatprep.subr.mxu0 %v626
    %1519 = vmatpush1.msra.mxu0 %v625
    %1520 = vmatprep.subr.mxu0 %v628
    %1521 = vmatpush1.msra.mxu0 %v627
    %1522 = vmatprep.subr.mxu0 %v630
    %1523 = vmatpush1.msra.mxu0 %v629
    %1524 = vmatprep.subr.mxu0 %v632
    %1525 = vmatpush1.msra.mxu0 %v631
    %1526 = vmatprep.subr.mxu0 %v634
    %1527 = vmatpush1.msra.mxu0 %v633
    %1528 = vmatprep.subr.mxu0 %v636
    %1529 = vmatpush1.msra.mxu0 %v635
    %1530 = vmatprep.subr.mxu0 %v638
    %1531 = vmatpush1.msra.mxu0 %v637
    %1532 = vmatprep.subr.mxu0 %v640
    %1533 = vmatpush1.msra.mxu0 %v639
    %1534 = vmatprep.subr.mxu0 %v642
    %1535 = vmatpush1.msra.mxu0 %v641
    %1536 = vmatprep.subr.mxu0 %v644
    %1537 = vmatpush1.msra.mxu0 %v643
    %1538 = vmatprep.subr.mxu0 %v646
    %1539 = vmatpush1.msra.mxu0 %v645
    %1540 = vmatprep.subr.mxu0 %v648
    %1541 = vmatpush1.msra.mxu0 %v647
    %1542 = vmatprep.subr.mxu0 %v650
    %1543 = vmatpush1.msra.mxu0 %v649
    %1544 = vmatprep.subr.mxu0 %v652
    %1545 = vmatpush1.msra.mxu0 %v651
    %1546 = vmatprep.subr.mxu0 %v654
    %1547 = vmatpush1.msra.mxu0 %v653
    %1548 = vmatprep.subr.mxu0 %v656
    %1549 = vmatpush1.msra.mxu0 %v655
    %1550 = vmatprep.subr.mxu0 %v658
    %1551 = vmatpush1.msra.mxu0 %v657
    %1552 = vmatprep.subr.mxu0 %v660
    %1553 = vmatpush1.msra.mxu0 %v659
    %1554 = vmatprep.subr.mxu0 %v662
    %1555 = vmatpush1.msra.mxu0 %v661
    %1556 = vmatprep.subr.mxu0 %v664
    %1557 = vmatpush1.msra.mxu0 %v663
    %1558 = vmatprep.subr.mxu0 %v666
    %1559 = vmatpush1.msra.mxu0 %v665
    %1560 = vmatprep.subr.mxu0 %v668
    %1561 = vmatpush1.msra.mxu0 %v667
    %1562 = vmatprep.subr.mxu0 %v670
    %1563 = vmatpush1.msra.mxu0 %v669
    %1564 = vmatprep.mubr.f32.mxu0 %v69
    %1565 = vmatmul.mubr.f32.gmra.mrb[0].mxu0 %v68
    %v1566 = vpop.f32.mrb[0].mxu0
    %v1567 = vadd.f32 %v1472, %v1566
    %v1568 = vpop.f32.mrb[0].mxu0
    %v1569 = vadd.f32 %v1474, %v1568
    %1570 = vmatprep.mubr.f32.mxu0 %v90
    %1571 = vmatmul.mubr.f32.gmra.mrb[0].mxu0 %v89
    %v1572 = vpop.f32.mrb[0].mxu0
    %v1573 = vadd.f32 %v1478, %v1572
    %v1574 = vpop.f32.mrb[0].mxu0
    %v1575 = vadd.f32 %v1480, %v1574
    %1576 = vmatprep.mubr.f32.mxu0 %v111
    %1577 = vmatmul.mubr.f32.gmra.mrb[0].mxu0 %v110
    %v1578 = vpop.f32.mrb[0].mxu0
    %v1579 = vadd.f32 %v1484, %v1578
    %v1580 = vpop.f32.mrb[0].mxu0
    %v1581 = vadd.f32 %v1486, %v1580
    %1582 = vmatprep.mubr.f32.mxu0 %v132
    %1583 = vmatmul.mubr.f32.gmra.mrb[0].mxu0 %v131
    %v1584 = vpop.f32.mrb[0].mxu0
    %v1585 = vadd.f32 %v1490, %v1584
    %v1586 = vpop.f32.mrb[0].mxu0
    %v1587 = vadd.f32 %v1492, %v1586
    %1588 = vmatprep.mubr.f32.mxu0 %v153
    %1589 = vmatmul.mubr.f32.gmra.mrb[0].mxu0 %v152
    %v1590 = vpop.f32.mrb[0].mxu0
    %v1591 = vadd.f32 %v1496, %v1590
    %v1592 = vpop.f32.mrb[0].mxu0
    %v1593 = vadd.f32 %v1498, %v1592
    %1594 = vdwg.mxu0
    %1595 = vmatprep.subr.mxu0 %v672
    %1596 = vmatpush1.msra.mxu0 %v671
    %1597 = vmatprep.subr.mxu0 %v674
    %1598 = vmatpush1.msra.mxu0 %v673
    %1599 = vmatprep.subr.mxu0 %v676
    %1600 = vmatpush1.msra.mxu0 %v675
    %1601 = vmatprep.subr.mxu0 %v678
    %1602 = vmatpush1.msra.mxu0 %v677
    %1603 = vmatprep.subr.mxu0 %v680
    %1604 = vmatpush1.msra.mxu0 %v679
    %1605 = vmatprep.subr.mxu0 %v682
    %1606 = vmatpush1.msra.mxu0 %v681
    %1607 = vmatprep.subr.mxu0 %v684
    %1608 = vmatpush1.msra.mxu0 %v683
    %1609 = vmatprep.subr.mxu0 %v686
    %1610 = vmatpush1.msra.mxu0 %v685
    %1611 = vmatprep.subr.mxu0 %v688
    %1612 = vmatpush1.msra.mxu0 %v687
    %1613 = vmatprep.subr.mxu0 %v690
    %1614 = vmatpush1.msra.mxu0 %v689
    %1615 = vmatprep.subr.mxu0 %v692
    %1616 = vmatpush1.msra.mxu0 %v691
    %1617 = vmatprep.subr.mxu0 %v694
    %1618 = vmatpush1.msra.mxu0 %v693
    %1619 = vmatprep.subr.mxu0 %v696
    %1620 = vmatpush1.msra.mxu0 %v695
    %1621 = vmatprep.subr.mxu0 %v698
    %1622 = vmatpush1.msra.mxu0 %v697
    %1623 = vmatprep.subr.mxu0 %v700
    %1624 = vmatpush1.msra.mxu0 %v699
    %1625 = vmatprep.subr.mxu0 %v702
    %1626 = vmatpush1.msra.mxu0 %v701
    %1627 = vmatprep.subr.mxu0 %v704
    %1628 = vmatpush1.msra.mxu0 %v703
    %1629 = vmatprep.subr.mxu0 %v706
    %1630 = vmatpush1.msra.mxu0 %v705
    %1631 = vmatprep.subr.mxu0 %v708
    %1632 = vmatpush1.msra.mxu0 %v707
    %1633 = vmatprep.subr.mxu0 %v710
    %1634 = vmatpush1.msra.mxu0 %v709
    %1635 = vmatprep.subr.mxu0 %v712
    %1636 = vmatpush1.msra.mxu0 %v711
    %1637 = vmatprep.subr.mxu0 %v714
    %1638 = vmatpush1.msra.mxu0 %v713
    %1639 = vmatprep.subr.mxu0 %v716
    %1640 = vmatpush1.msra.mxu0 %v715
    %1641 = vmatprep.subr.mxu0 %v718
    %1642 = vmatpush1.msra.mxu0 %v717
    %1643 = vmatprep.subr.mxu0 %v720
    %1644 = vmatpush1.msra.mxu0 %v719
    %1645 = vmatprep.subr.mxu0 %v722
    %1646 = vmatpush1.msra.mxu0 %v721
    %1647 = vmatprep.subr.mxu0 %v724
    %1648 = vmatpush1.msra.mxu0 %v723
    %1649 = vmatprep.subr.mxu0 %v726
    %1650 = vmatpush1.msra.mxu0 %v725
    %1651 = vmatprep.subr.mxu0 %v728
    %1652 = vmatpush1.msra.mxu0 %v727
    %1653 = vmatprep.subr.mxu0 %v730
    %1654 = vmatpush1.msra.mxu0 %v729
    %1655 = vmatprep.subr.mxu0 %v732
    %1656 = vmatpush1.msra.mxu0 %v731
    %1657 = vmatprep.subr.mxu0 %v734
    %1658 = vmatpush1.msra.mxu0 %v733
    %1659 = vmatprep.mubr.f32.mxu0 %v71
    %1660 = vmatmul.mubr.f32.gmra.mrb[0].mxu0 %v70
    %v1661 = vpop.f32.mrb[0].mxu0
    %v1662 = vadd.f32 %v1567, %v1661
    %v1663 = vpop.f32.mrb[0].mxu0
    %v1664 = vadd.f32 %v1569, %v1663
    %1665 = vmatprep.mubr.f32.mxu0 %v92
    %1666 = vmatmul.mubr.f32.gmra.mrb[0].mxu0 %v91
    %v1667 = vpop.f32.mrb[0].mxu0
    %v1668 = vadd.f32 %v1573, %v1667
    %v1669 = vpop.f32.mrb[0].mxu0
    %v1670 = vadd.f32 %v1575, %v1669
    %1671 = vmatprep.mubr.f32.mxu0 %v113
    %1672 = vmatmul.mubr.f32.gmra.mrb[0].mxu0 %v112
    %v1673 = vpop.f32.mrb[0].mxu0
    %v1674 = vadd.f32 %v1579, %v1673
    %v1675 = vpop.f32.mrb[0].mxu0
    %v1676 = vadd.f32 %v1581, %v1675
    %1677 = vmatprep.mubr.f32.mxu0 %v134
    %1678 = vmatmul.mubr.f32.gmra.mrb[0].mxu0 %v133
    %v1679 = vpop.f32.mrb[0].mxu0
    %v1680 = vadd.f32 %v1585, %v1679
    %v1681 = vpop.f32.mrb[0].mxu0
    %v1682 = vadd.f32 %v1587, %v1681
    %1683 = vmatprep.mubr.f32.mxu0 %v155
    %1684 = vmatmul.mubr.f32.gmra.mrb[0].mxu0 %v154
    %v1685 = vpop.f32.mrb[0].mxu0
    %v1686 = vadd.f32 %v1591, %v1685
    %v1687 = vpop.f32.mrb[0].mxu0
    %v1688 = vadd.f32 %v1593, %v1687
    %1689 = vdwg.mxu0
    %1690 = vmatprep.subr.mxu0 %v736
    %1691 = vmatpush1.msra.mxu0 %v735
    %1692 = vmatprep.subr.mxu0 %v738
    %1693 = vmatpush1.msra.mxu0 %v737
    %1694 = vmatprep.subr.mxu0 %v740
    %1695 = vmatpush1.msra.mxu0 %v739
    %1696 = vmatprep.subr.mxu0 %v742
    %1697 = vmatpush1.msra.mxu0 %v741
    %1698 = vmatprep.subr.mxu0 %v744
    %1699 = vmatpush1.msra.mxu0 %v743
    %1700 = vmatprep.subr.mxu0 %v746
    %1701 = vmatpush1.msra.mxu0 %v745
    %1702 = vmatprep.subr.mxu0 %v748
    %1703 = vmatpush1.msra.mxu0 %v747
    %1704 = vmatprep.subr.mxu0 %v750
    %1705 = vmatpush1.msra.mxu0 %v749
    %1706 = vmatprep.subr.mxu0 %v752
    %1707 = vmatpush1.msra.mxu0 %v751
    %1708 = vmatprep.subr.mxu0 %v754
    %1709 = vmatpush1.msra.mxu0 %v753
    %1710 = vmatprep.subr.mxu0 %v756
    %1711 = vmatpush1.msra.mxu0 %v755
    %1712 = vmatprep.subr.mxu0 %v758
    %1713 = vmatpush1.msra.mxu0 %v757
    %1714 = vmatprep.subr.mxu0 %v760
    %1715 = vmatpush1.msra.mxu0 %v759
    %1716 = vmatprep.subr.mxu0 %v762
    %1717 = vmatpush1.msra.mxu0 %v761
    %1718 = vmatprep.subr.mxu0 %v764
    %1719 = vmatpush1.msra.mxu0 %v763
    %1720 = vmatprep.subr.mxu0 %v766
    %1721 = vmatpush1.msra.mxu0 %v765
    %1722 = vmatprep.subr.mxu0 %v768
    %1723 = vmatpush1.msra.mxu0 %v767
    %1724 = vmatprep.subr.mxu0 %v770
    %1725 = vmatpush1.msra.mxu0 %v769
    %1726 = vmatprep.subr.mxu0 %v772
    %1727 = vmatpush1.msra.mxu0 %v771
    %1728 = vmatprep.subr.mxu0 %v774
    %1729 = vmatpush1.msra.mxu0 %v773
    %1730 = vmatprep.subr.mxu0 %v776
    %1731 = vmatpush1.msra.mxu0 %v775
    %1732 = vmatprep.subr.mxu0 %v778
    %1733 = vmatpush1.msra.mxu0 %v777
    %1734 = vmatprep.subr.mxu0 %v780
    %1735 = vmatpush1.msra.mxu0 %v779
    %1736 = vmatprep.subr.mxu0 %v782
    %1737 = vmatpush1.msra.mxu0 %v781
    %1738 = vmatprep.subr.mxu0 %v784
    %1739 = vmatpush1.msra.mxu0 %v783
    %1740 = vmatprep.subr.mxu0 %v786
    %1741 = vmatpush1.msra.mxu0 %v785
    %1742 = vmatprep.subr.mxu0 %v788
    %1743 = vmatpush1.msra.mxu0 %v787
    %1744 = vmatprep.subr.mxu0 %v790
    %1745 = vmatpush1.msra.mxu0 %v789
    %1746 = vmatprep.subr.mxu0 %v792
    %1747 = vmatpush1.msra.mxu0 %v791
    %1748 = vmatprep.subr.mxu0 %v794
    %1749 = vmatpush1.msra.mxu0 %v793
    %1750 = vmatprep.subr.mxu0 %v796
    %1751 = vmatpush1.msra.mxu0 %v795
    %1752 = vmatprep.subr.mxu0 %v798
    %1753 = vmatpush1.msra.mxu0 %v797
    %1754 = vmatprep.mubr.f32.mxu0 %v73
    %1755 = vmatmul.mubr.f32.gmra.mrb[0].mxu0 %v72
    %v1756 = vpop.f32.mrb[0].mxu0
    %v1757 = vadd.f32 %v1662, %v1756
    %v1758 = vpop.f32.mrb[0].mxu0
    %v1759 = vadd.f32 %v1664, %v1758
    %1760 = vmatprep.mubr.f32.mxu0 %v94
    %1761 = vmatmul.mubr.f32.gmra.mrb[0].mxu0 %v93
    %v1762 = vpop.f32.mrb[0].mxu0
    %v1763 = vadd.f32 %v1668, %v1762
    %v1764 = vpop.f32.mrb[0].mxu0
    %v1765 = vadd.f32 %v1670, %v1764
    %1766 = vmatprep.mubr.f32.mxu0 %v115
    %1767 = vmatmul.mubr.f32.gmra.mrb[0].mxu0 %v114
    %v1768 = vpop.f32.mrb[0].mxu0
    %v1769 = vadd.f32 %v1674, %v1768
    %v1770 = vpop.f32.mrb[0].mxu0
    %v1771 = vadd.f32 %v1676, %v1770
    %1772 = vmatprep.mubr.f32.mxu0 %v136
    %1773 = vmatmul.mubr.f32.gmra.mrb[0].mxu0 %v135
    %v1774 = vpop.f32.mrb[0].mxu0
    %v1775 = vadd.f32 %v1680, %v1774
    %v1776 = vpop.f32.mrb[0].mxu0
    %v1777 = vadd.f32 %v1682, %v1776
    %1778 = vmatprep.mubr.f32.mxu0 %v157
    %1779 = vmatmul.mubr.f32.gmra.mrb[0].mxu0 %v156
    %v1780 = vpop.f32.mrb[0].mxu0
    %v1781 = vadd.f32 %v1686, %v1780
    %v1782 = vpop.f32.mrb[0].mxu0
    %v1783 = vadd.f32 %v1688, %v1782
    %1784 = vdwg.mxu0
    %1785 = vmatprep.subr.mxu0 %v800
    %1786 = vmatpush1.msra.mxu0 %v799
    %1787 = vmatprep.subr.mxu0 %v802
    %1788 = vmatpush1.msra.mxu0 %v801
    %1789 = vmatprep.subr.mxu0 %v804
    %1790 = vmatpush1.msra.mxu0 %v803
    %1791 = vmatprep.subr.mxu0 %v806
    %1792 = vmatpush1.msra.mxu0 %v805
    %1793 = vmatprep.subr.mxu0 0.0
    %1794 = vmatpush1.msra.mxu0 0.0
    %1795 = vmatprep.subr.mxu0 0.0
    %1796 = vmatpush1.msra.mxu0 0.0
    %1797 = vmatprep.subr.mxu0 0.0
    %1798 = vmatpush1.msra.mxu0 0.0
    %1799 = vmatprep.subr.mxu0 0.0
    %1800 = vmatpush1.msra.mxu0 0.0
    %1801 = vmatprep.subr.mxu0 0.0
    %1802 = vmatpush1.msra.mxu0 0.0
    %1803 = vmatprep.subr.mxu0 0.0
    %1804 = vmatpush1.msra.mxu0 0.0
    %1805 = vmatprep.subr.mxu0 0.0
    %1806 = vmatpush1.msra.mxu0 0.0
    %1807 = vmatprep.subr.mxu0 0.0
    %1808 = vmatpush1.msra.mxu0 0.0
    %1809 = vmatprep.subr.mxu0 0.0
    %1810 = vmatpush1.msra.mxu0 0.0
    %1811 = vmatprep.subr.mxu0 0.0
    %1812 = vmatpush1.msra.mxu0 0.0
    %1813 = vmatprep.subr.mxu0 0.0
    %1814 = vmatpush1.msra.mxu0 0.0
    %1815 = vmatprep.subr.mxu0 0.0
    %1816 = vmatpush1.msra.mxu0 0.0
    %1817 = vmatprep.subr.mxu0 0.0
    %1818 = vmatpush1.msra.mxu0 0.0
    %1819 = vmatprep.subr.mxu0 0.0
    %1820 = vmatpush1.msra.mxu0 0.0
    %1821 = vmatprep.subr.mxu0 0.0
    %1822 = vmatpush1.msra.mxu0 0.0
    %1823 = vmatprep.subr.mxu0 0.0
    %1824 = vmatpush1.msra.mxu0 0.0
    %1825 = vmatprep.subr.mxu0 0.0
    %1826 = vmatpush1.msra.mxu0 0.0
    %1827 = vmatprep.subr.mxu0 0.0
    %1828 = vmatpush1.msra.mxu0 0.0
    %1829 = vmatprep.subr.mxu0 0.0
    %1830 = vmatpush1.msra.mxu0 0.0
    %1831 = vmatprep.subr.mxu0 0.0
    %1832 = vmatpush1.msra.mxu0 0.0
    %1833 = vmatprep.subr.mxu0 0.0
    %1834 = vmatpush1.msra.mxu0 0.0
    %1835 = vmatprep.subr.mxu0 0.0
    %1836 = vmatpush1.msra.mxu0 0.0
    %1837 = vmatprep.subr.mxu0 0.0
    %1838 = vmatpush1.msra.mxu0 0.0
    %1839 = vmatprep.subr.mxu0 0.0
    %1840 = vmatpush1.msra.mxu0 0.0
    %1841 = vmatprep.subr.mxu0 0.0
    %1842 = vmatpush1.msra.mxu0 0.0
    %1843 = vmatprep.subr.mxu0 0.0
    %1844 = vmatpush1.msra.mxu0 0.0
    %1845 = vmatprep.subr.mxu0 0.0
    %1846 = vmatpush1.msra.mxu0 0.0
    %1847 = vmatprep.subr.mxu0 0.0
    %1848 = vmatpush1.msra.mxu0 0.0
    %1849 = vmatprep.mubr.f32.mxu0 0.0
    %1850 = vmatmul.mubr.f32.gmra.mrb[0].mxu0 %v821
    %v1851 = vpop.f32.mrb[0].mxu0
    %v1852 = vadd.f32 %v1757, %v1851
    %v1853 = vpop.f32.mrb[0].mxu0
    %v1854 = vadd.f32 %v1759, %v1853
    %1855 = vmatprep.mubr.f32.mxu0 0.0
    %1856 = vmatmul.mubr.f32.gmra.mrb[0].mxu0 %v824
    %v1857 = vpop.f32.mrb[0].mxu0
    %v1858 = vadd.f32 %v1763, %v1857
    %v1859 = vpop.f32.mrb[0].mxu0
    %v1860 = vadd.f32 %v1765, %v1859
    %1861 = vmatprep.mubr.f32.mxu0 0.0
    %1862 = vmatmul.mubr.f32.gmra.mrb[0].mxu0 %v827
    %v1863 = vpop.f32.mrb[0].mxu0
    %v1864 = vadd.f32 %v1769, %v1863
    %v1865 = vpop.f32.mrb[0].mxu0
    %v1866 = vadd.f32 %v1771, %v1865
    %1867 = vmatprep.mubr.f32.mxu0 0.0
    %1868 = vmatmul.mubr.f32.gmra.mrb[0].mxu0 %v830
    %v1869 = vpop.f32.mrb[0].mxu0
    %v1870 = vadd.f32 %v1775, %v1869
    %v1871 = vpop.f32.mrb[0].mxu0
    %v1872 = vadd.f32 %v1777, %v1871
    %1873 = vmatprep.mubr.f32.mxu0 0.0
    %1874 = vmatmul.mubr.f32.gmra.mrb[0].mxu0 %v833
    %v1875 = vpop.f32.mrb[0].mxu0
    %v1876 = vadd.f32 %v1781, %v1875
    %v1877 = vpop.f32.mrb[0].mxu0
    %v1878 = vadd.f32 %v1783, %v1877
    %1879 = vdwg.mxu0
    %v1880 = vmul.f32 %v1852, %v1852
    %v1881 = vmul.f32 %v1854, %v1854
    %v1882 = vmul.f32 %v1858, %v1858
    %v1883 = vmul.f32 %v1860, %v1860
    %v1884 = vmul.f32 %v1864, %v1864
    %v1885 = vmul.f32 %v1866, %v1866
    %v1886 = vmul.f32 %v1870, %v1870
    %v1887 = vmul.f32 %v1872, %v1872
    %v1888 = vmul.f32 %v1876, %v1876
    %v1889 = vmul.f32 %v1878, %v1878
    %1895 = vrot.lane.b32.xlu0 %v1880, 96
    %v1896 = vpop.permute.xlu0 %1895
    %1897 = vrot.lane.b32.xlu0 %v1882, 96
    %v1898 = vpop.permute.xlu0 %1897
    %1899 = vrot.lane.b32.xlu0 %v1884, 96
    %v1900 = vpop.permute.xlu0 %1899
    %1901 = vrot.lane.b32.xlu0 %v1886, 96
    %v1902 = vpop.permute.xlu0 %1901
    %1903 = vrot.lane.b32.xlu0 %v1888, 96
    %v1904 = vpop.permute.xlu0 %1903
    %v1910 = vadd.f32 %v1880, %v1896
    %v1911 = vadd.f32 %v1882, %v1898
    %v1912 = vadd.f32 %v1884, %v1900
    %v1913 = vadd.f32 %v1886, %v1902
    %v1914 = vadd.f32 %v1888, %v1904
    %1915 = vrot.lane.b32.xlu0 %v1880, 64
    %v1916 = vpop.permute.xlu0 %1915
    %1917 = vrot.lane.b32.xlu0 %v1882, 64
    %v1918 = vpop.permute.xlu0 %1917
    %1919 = vrot.lane.b32.xlu0 %v1884, 64
    %v1920 = vpop.permute.xlu0 %1919
    %1921 = vrot.lane.b32.xlu0 %v1886, 64
    %v1922 = vpop.permute.xlu0 %1921
    %1923 = vrot.lane.b32.xlu0 %v1888, 64
    %v1924 = vpop.permute.xlu0 %1923
    %v1930 = vadd.f32 %v1910, %v1916
    %v1931 = vadd.f32 %v1911, %v1918
    %v1932 = vadd.f32 %v1912, %v1920
    %v1933 = vadd.f32 %v1913, %v1922
    %v1934 = vadd.f32 %v1914, %v1924
    %1935 = vrot.lane.b32.xlu0 %v1880, 32
    %v1936 = vpop.permute.xlu0 %1935
    %1937 = vrot.lane.b32.xlu0 %v1882, 32
    %v1938 = vpop.permute.xlu0 %1937
    %1939 = vrot.lane.b32.xlu0 %v1884, 32
    %v1940 = vpop.permute.xlu0 %1939
    %1941 = vrot.lane.b32.xlu0 %v1886, 32
    %v1942 = vpop.permute.xlu0 %1941
    %1943 = vrot.lane.b32.xlu0 %v1888, 32
    %v1944 = vpop.permute.xlu0 %1943
    %v1950 = vadd.f32 %v1930, %v1936
    %v1951 = vadd.f32 %v1931, %v1938
    %v1952 = vadd.f32 %v1932, %v1940
    %v1953 = vadd.f32 %v1933, %v1942
    %v1954 = vadd.f32 %v1934, %v1944
    %v1955 = vadd.f32 %v1950, %v1881
    %v1956 = vadd.f32 %v1951, %v1883
    %v1957 = vadd.f32 %v1952, %v1885
    %v1958 = vadd.f32 %v1953, %v1887
    %v1959 = vadd.f32 %v1954, %v1889
    %1965 = vrot.lane.b32.xlu0 %v1881, 96
    %v1966 = vpop.permute.xlu0 %1965
    %1967 = vrot.lane.b32.xlu0 %v1883, 96
    %v1968 = vpop.permute.xlu0 %1967
    %1969 = vrot.lane.b32.xlu0 %v1885, 96
    %v1970 = vpop.permute.xlu0 %1969
    %1971 = vrot.lane.b32.xlu0 %v1887, 96
    %v1972 = vpop.permute.xlu0 %1971
    %1973 = vrot.lane.b32.xlu0 %v1889, 96
    %v1974 = vpop.permute.xlu0 %1973
    %v1980 = vadd.f32 %v1955, %v1966
    %v1981 = vadd.f32 %v1956, %v1968
    %v1982 = vadd.f32 %v1957, %v1970
    %v1983 = vadd.f32 %v1958, %v1972
    %v1984 = vadd.f32 %v1959, %v1974
    %1985 = vrot.lane.b32.xlu0 %v1881, 64
    %v1986 = vpop.permute.xlu0 %1985
    %1987 = vrot.lane.b32.xlu0 %v1883, 64
    %v1988 = vpop.permute.xlu0 %1987
    %1989 = vrot.lane.b32.xlu0 %v1885, 64
    %v1990 = vpop.permute.xlu0 %1989
    %1991 = vrot.lane.b32.xlu0 %v1887, 64
    %v1992 = vpop.permute.xlu0 %1991
    %1993 = vrot.lane.b32.xlu0 %v1889, 64
    %v1994 = vpop.permute.xlu0 %1993
    %v2000 = vadd.f32 %v1980, %v1986
    %v2001 = vadd.f32 %v1981, %v1988
    %v2002 = vadd.f32 %v1982, %v1990
    %v2003 = vadd.f32 %v1983, %v1992
    %v2004 = vadd.f32 %v1984, %v1994
    %2005 = vrot.lane.b32.xlu0 %v1881, 32
    %v2006 = vpop.permute.xlu0 %2005
    %2007 = vrot.lane.b32.xlu0 %v1883, 32
    %v2008 = vpop.permute.xlu0 %2007
    %2009 = vrot.lane.b32.xlu0 %v1885, 32
    %v2010 = vpop.permute.xlu0 %2009
    %2011 = vrot.lane.b32.xlu0 %v1887, 32
    %v2012 = vpop.permute.xlu0 %2011
    %2013 = vrot.lane.b32.xlu0 %v1889, 32
    %v2014 = vpop.permute.xlu0 %2013
    %v2020 = vadd.f32 %v2000, %v2006
    %v2021 = vadd.f32 %v2001, %v2008
    %v2022 = vadd.f32 %v2002, %v2010
    %v2023 = vadd.f32 %v2003, %v2012
    %v2024 = vadd.f32 %v2004, %v2014
    %v2025 = vrsqrt.pop %v2020
    %v2026 = vmul.f32 %v2020, %v2025
    %vm2027 = vcmp.eq.f32.partialorder %v2020, inf
    %v2028 = vsel %vm2027, %v2020, %v2026
    %vm2029 = vcmp.eq.f32.partialorder %v2020, 0.0
    %v2030 = vand.u32 %v2020, 2147483648
    %v2031 = vsel %vm2029, %v2030, %v2028
    %v2032 = vrsqrt.pop %v2021
    %v2033 = vmul.f32 %v2021, %v2032
    %vm2034 = vcmp.eq.f32.partialorder %v2021, inf
    %v2035 = vsel %vm2034, %v2021, %v2033
    %vm2036 = vcmp.eq.f32.partialorder %v2021, 0.0
    %v2037 = vand.u32 %v2021, 2147483648
    %v2038 = vsel %vm2036, %v2037, %v2035
    %v2039 = vrsqrt.pop %v2022
    %v2040 = vmul.f32 %v2022, %v2039
    %vm2041 = vcmp.eq.f32.partialorder %v2022, inf
    %v2042 = vsel %vm2041, %v2022, %v2040
    %vm2043 = vcmp.eq.f32.partialorder %v2022, 0.0
    %v2044 = vand.u32 %v2022, 2147483648
    %v2045 = vsel %vm2043, %v2044, %v2042
    %v2046 = vrsqrt.pop %v2023
    %v2047 = vmul.f32 %v2023, %v2046
    %vm2048 = vcmp.eq.f32.partialorder %v2023, inf
    %v2049 = vsel %vm2048, %v2023, %v2047
    %vm2050 = vcmp.eq.f32.partialorder %v2023, 0.0
    %v2051 = vand.u32 %v2023, 2147483648
    %v2052 = vsel %vm2050, %v2051, %v2049
    %v2053 = vrsqrt.pop %v2024
    %v2054 = vmul.f32 %v2024, %v2053
    %vm2055 = vcmp.eq.f32.partialorder %v2024, inf
    %v2056 = vsel %vm2055, %v2024, %v2054
    %vm2057 = vcmp.eq.f32.partialorder %v2024, 0.0
    %v2058 = vand.u32 %v2024, 2147483648
    %v2059 = vsel %vm2057, %v2058, %v2056
    %v2060 = vadd.f32 %v2020, 1.0
    %v2061 = vadd.f32 %v2021, 1.0
    %v2062 = vadd.f32 %v2022, 1.0
    %v2063 = vadd.f32 %v2023, 1.0
    %v2064 = vadd.f32 %v2024, 1.0
    %v2065 = vrcp.pop %v2060
    %v2066 = vmul.f32 %v2031, %v2065
    %v2067 = vrcp.pop %v2061
    %v2068 = vmul.f32 %v2038, %v2067
    %v2069 = vrcp.pop %v2062
    %v2070 = vmul.f32 %v2045, %v2069
    %v2071 = vrcp.pop %v2063
    %v2072 = vmul.f32 %v2052, %v2071
    %v2073 = vrcp.pop %v2064
    %v2074 = vmul.f32 %v2059, %v2073
    %2080 = vrot.lane.b32.xlu0 %v2066, 32
    %v2081 = vpop.permute.xlu0 %2080
    %2082 = vrot.lane.b32.xlu0 %v2068, 32
    %v2083 = vpop.permute.xlu0 %2082
    %2084 = vrot.lane.b32.xlu0 %v2070, 32
    %v2085 = vpop.permute.xlu0 %2084
    %2086 = vrot.lane.b32.xlu0 %v2072, 32
    %v2087 = vpop.permute.xlu0 %2086
    %2088 = vrot.lane.b32.xlu0 %v2074, 32
    %v2089 = vpop.permute.xlu0 %2088
    %2095 = vrot.lane.b32.xlu0 %v2066, 64
    %v2096 = vpop.permute.xlu0 %2095
    %2097 = vrot.lane.b32.xlu0 %v2068, 64
    %v2098 = vpop.permute.xlu0 %2097
    %2099 = vrot.lane.b32.xlu0 %v2070, 64
    %v2100 = vpop.permute.xlu0 %2099
    %2101 = vrot.lane.b32.xlu0 %v2072, 64
    %v2102 = vpop.permute.xlu0 %2101
    %2103 = vrot.lane.b32.xlu0 %v2074, 64
    %v2104 = vpop.permute.xlu0 %2103
    %2110 = vrot.lane.b32.xlu0 %v2066, 96
    %v2111 = vpop.permute.xlu0 %2110
    %2112 = vrot.lane.b32.xlu0 %v2068, 96
    %v2113 = vpop.permute.xlu0 %2112
    %2114 = vrot.lane.b32.xlu0 %v2070, 96
    %v2115 = vpop.permute.xlu0 %2114
    %2116 = vrot.lane.b32.xlu0 %v2072, 96
    %v2117 = vpop.permute.xlu0 %2116
    %2118 = vrot.lane.b32.xlu0 %v2074, 96
    %v2119 = vpop.permute.xlu0 %2118
    %v2125 = vsel %vm819, %v2066, %v2081
    %v2126 = vsel %vm819, %v2068, %v2083
    %v2127 = vsel %vm819, %v2070, %v2085
    %v2128 = vsel %vm819, %v2072, %v2087
    %v2129 = vsel %vm819, %v2074, %v2089
    %vm2130 = vcmask 523264
    %v2131 = vsel %vm2130, %v2125, %v2096
    %v2132 = vsel %vm2130, %v2126, %v2098
    %v2133 = vsel %vm2130, %v2127, %v2100
    %v2134 = vsel %vm2130, %v2128, %v2102
    %v2135 = vsel %vm2130, %v2129, %v2104
    %vm2136 = vcmask 785408
    %v2137 = vsel %vm2136, %v2131, %v2111
    %v2138 = vsel %vm2136, %v2132, %v2113
    %v2139 = vsel %vm2136, %v2133, %v2115
    %v2140 = vsel %vm2136, %v2134, %v2117
    %v2141 = vsel %vm2136, %v2135, %v2119
    %v2142 = vmul.f32 %v1852, %v2137
    %v2143 = vmul.f32 %v1854, %v2137
    %v2144 = vmul.f32 %v1858, %v2138
    %v2145 = vmul.f32 %v1860, %v2138
    %v2146 = vmul.f32 %v1864, %v2139
    %v2147 = vmul.f32 %v1866, %v2139
    %v2148 = vmul.f32 %v1870, %v2140
    %v2149 = vmul.f32 %v1872, %v2140
    %v2150 = vmul.f32 %v1876, %v2141
    %v2151 = vmul.f32 %v1878, %v2141
    %2152 = vst [vmem:[#allocation8] sm:$0xff] %v2142
    %2153 = vst [vmem:[#allocation8 + $0x8] sm:$0xff] %v2143
    %2154 = vst [vmem:[#allocation8 + $0x10] sm:$0xff] %v2144
    %2155 = vst [vmem:[#allocation8 + $0x18] sm:$0xff] %v2145
    %2156 = vst [vmem:[#allocation8 + $0x20] sm:$0xff] %v2146
    %2157 = vst [vmem:[#allocation8 + $0x28] sm:$0xff] %v2147
    %2158 = vst [vmem:[#allocation8 + $0x30] sm:$0xff] %v2148
    %2159 = vst [vmem:[#allocation8 + $0x38] sm:$0xff] %v2149
    %2160 = vst [vmem:[#allocation8 + $0x40] sm:$0xf] %v2150
    %2161 = vst [vmem:[#allocation8 + $0x48] sm:$0xf] %v2151
    // Predicated region
    $region26: #{tpu_custom_call.1} parent=1 // pred_check
      _
    $region27: #{tpu_custom_call.1} parent=1 // pred_check_branch
      %2163 = sbr.rel (0) target = $region29
    $region28: #{tpu_custom_call.1} parent=1 // pred_region
      %s2165 = ssub.s32 1280, 1280
      %2166 = vsyncadd [#allocation4], %s2165
      %s2167 = sshll.u32 [#allocation8], 4
      %s2168 = int_to_ptr.vmem [resolvable:$true] %s2167
      %2173 = dma.vmem_to_hbm [thread:$0]  %s2168, 1280, %s3, [#allocation4], 256, 256, 16
    $region29: #{tpu_custom_call.1} parent=1 // pred_fallthru
      _
    // Predicated region
    $region30: #{tpu_custom_call.1} parent=1 // pred_check
      _
    $region31: #{tpu_custom_call.1} parent=1 // pred_check_branch
      %2175 = sbr.rel (0) target = $region33
    $region32: #{tpu_custom_call.1} parent=1 // pred_region
      %2176 = dma.done [#allocation4], 1280
    $region33: #{tpu_custom_call.1} parent=1 // pred_fallthru
      _
    %2177 = vsyncpa [#allocation3], 1
    %2178 = vsyncpa [#allocation6], 1
    %2179 = vsyncpa [#allocation4], 1

</llo_original>
